<compile_context>
chip_gen: v5e
topology: v5e:2x2
jax: 0.10.0
libtpu: 0.0.40
codegen_flags: <defaults>
</compile_context>

<pallas_src>
import functools
import math

import jax
import jax.numpy as jnp
from jax.experimental import pallas as pl
from jax.experimental.pallas import tpu as pltpu


def _round_up(x, m):
    return (x + m - 1) // m * m


def _pick_batch_tile(B, Sp, Hp, Dp, budget_bytes=12 * 1024 * 1024):
    """Largest divisor of B whose per-step VMEM footprint fits the budget."""
    per_batch = 2 * (Sp * Hp * 2 + Sp * Dp * 4 + Sp * Sp * 4)   # pipelined blocks
    per_batch += (3 * Sp * Dp + 2 * Sp * Sp) * 4                # f32 intermediates
    tb = max(1, min(B, budget_bytes // max(per_batch, 1)))
    while B % tb:
        tb -= 1
    return tb


def _attention_head_kernel(x_ref, wq_ref, bq_ref, wk_ref, bk_ref, wv_ref,
                           bv_ref, out_ref, probs_ref, *, batch_tile, seq_pad,
                           seq_len):
    """One grid step = `batch_tile` batch elements.

    x_ref:     (TB*Sp, Hp)   bf16, batch folded into the sublane/M axis
    w*_ref:    (Hp, Dp)      bf16, pre-transposed (Wq also pre-scaled)
    b*_ref:    (1, Dp)       f32  (bq pre-scaled)
    out_ref:   (TB, Sp, Dp)  f32
    probs_ref: (TB, Sp, Sp)  f32
    """
    x = x_ref[...]                                          # (TB*Sp, Hp) bf16

    # Q/K/V projections: one MXU matmul each with M = TB*Sp.
    q = jnp.dot(x, wq_ref[...], preferred_element_type=jnp.float32) + bq_ref[...]
    k = jnp.dot(x, wk_ref[...], preferred_element_type=jnp.float32) + bk_ref[...]
    v = jnp.dot(x, wv_ref[...], preferred_element_type=jnp.float32) + bv_ref[...]

    dp = q.shape[-1]
    q = q.reshape(batch_tile, seq_pad, dp)
    k = k.reshape(batch_tile, seq_pad, dp)
    v = v.reshape(batch_tile, seq_pad, dp)

    # scores = (Q / sqrt(Dh)) @ K^T; contraction on the last dim of both
    # operands so no transposed copy of K is materialized.  The 1/sqrt(Dh)
    # scale is already folded into Wq / bq.
    scores = jax.lax.dot_general(
        q.astype(jnp.bfloat16), k.astype(jnp.bfloat16),
        dimension_numbers=(((2,), (2,)), ((0,), (0,))),
        preferred_element_type=jnp.float32)                 # (TB, Sp, Sp) f32

    # Mask zero-padded key positions (their K rows equal the bias).
    if seq_pad > seq_len:
        key_ids = jax.lax.broadcasted_iota(jnp.int32, (1, 1, seq_pad), 2)
        scores = jnp.where(key_ids < seq_len, scores, jnp.float32(-1e30))

    # Numerically stable softmax, kept in f32.
    m = jnp.max(scores, axis=-1, keepdims=True)
    e = jnp.exp(scores - m)
    denom = jnp.sum(e, axis=-1, keepdims=True)
    probs = e * pl.reciprocal(denom, approx=True)           # EUP vrcp

    # Dropout is the identity at inference time.

    out = jax.lax.dot_general(
        probs.astype(jnp.bfloat16), v.astype(jnp.bfloat16),
        dimension_numbers=(((2,), (1,)), ((0,), (0,))),
        preferred_element_type=jnp.float32)                 # (TB, Sp, Dp) f32

    out_ref[...] = out.astype(out_ref.dtype)
    probs_ref[...] = probs.astype(probs_ref.dtype)


def attention_head_forward(x, wq, bq, wk, bk, wv, bv,
                           *, compute_dtype=jnp.bfloat16):
    """x: (B, S, H).  w*: (Dh, H) PyTorch nn.Linear layout, b*: (Dh,).

    Returns (attention_output (B, S, Dh) f32, attention_probs (B, S, S) f32).
    """
    B, S, H = x.shape
    Dh = wq.shape[0]

    # Lane-dense padded sizes (multiples of 128 on every lane axis).
    Sp = _round_up(S, 128)
    Hp = _round_up(H, 128)
    Dp = _round_up(Dh, 128)

    scale = 1.0 / math.sqrt(Dh)

    def prep_w(w, s=1.0):
        wt = (w.T.astype(jnp.float32) * s).astype(compute_dtype)      # (H, Dh)
        return jnp.pad(wt, ((0, Hp - H), (0, Dp - Dh)))

    def prep_b(b, s=1.0):
        return jnp.pad((b.astype(jnp.float32) * s)[None, :],
                       ((0, 0), (0, Dp - Dh)))

    wq_p, wk_p, wv_p = prep_w(wq, scale), prep_w(wk), prep_w(wv)
    bq_p, bk_p, bv_p = prep_b(bq, scale), prep_b(bk), prep_b(bv)

    # Pad x and fold the batch into the sublane (M) axis: (B*Sp, Hp).
    x_p = jnp.pad(x.astype(compute_dtype), ((0, 0), (0, Sp - S), (0, Hp - H)))
    x_p = x_p.reshape(B * Sp, Hp)

    TB = _pick_batch_tile(B, Sp, Hp, Dp)
    grid = (B // TB,)

    kernel = functools.partial(_attention_head_kernel, batch_tile=TB,
                               seq_pad=Sp, seq_len=S)

    out_p, probs_p = pl.pallas_call(
        kernel,
        out_shape=(
            jax.ShapeDtypeStruct((B, Sp, Dp), jnp.float32),
            jax.ShapeDtypeStruct((B, Sp, Sp), jnp.float32),
        ),
        grid_spec=pltpu.PrefetchScalarGridSpec(
            num_scalar_prefetch=0,
            grid=grid,
            in_specs=[
                pl.BlockSpec((TB * Sp, Hp), lambda b: (b, 0)),   # x (batch folded)
                pl.BlockSpec((Hp, Dp), lambda b: (0, 0)),        # Wq^T * scale
                pl.BlockSpec((1, Dp), lambda b: (0, 0)),         # bq * scale
                pl.BlockSpec((Hp, Dp), lambda b: (0, 0)),        # Wk^T
                pl.BlockSpec((1, Dp), lambda b: (0, 0)),         # bk
                pl.BlockSpec((Hp, Dp), lambda b: (0, 0)),        # Wv^T
                pl.BlockSpec((1, Dp), lambda b: (0, 0)),         # bv
            ],
            out_specs=[
                pl.BlockSpec((TB, Sp, Dp), lambda b: (b, 0, 0)),
                pl.BlockSpec((TB, Sp, Sp), lambda b: (b, 0, 0)),
            ],
        ),
        compiler_params=pltpu.CompilerParams(
            dimension_semantics=("parallel",),   # shards batch over v7x's 2 TCs
            vmem_limit_bytes=32 * 1024 * 1024,
        ),
    )(x_p, wq_p, bq_p, wk_p, bk_p, wv_p, bv_p)

    return out_p[:, :S, :Dh], probs_p[:, :S, :S]


def _reference(x, wq, bq, wk, bk, wv, bv):
    q = jnp.einsum("bsh,dh->bsd", x, wq) + bq
    k = jnp.einsum("bsh,dh->bsd", x, wk) + bk
    v = jnp.einsum("bsh,dh->bsd", x, wv) + bv
    scores = jnp.einsum("bqd,bkd->bqk", q, k) / math.sqrt(wq.shape[0])
    probs = jax.nn.softmax(scores, axis=-1)
    out = jnp.einsum("bqk,bkd->bqd", probs, v)
    return out, probs


if __name__ == "__main__":
    # Small shapes consistent with the module: batch=2, seq=8, hidden=32, head=16
    B, S, H, Dh = 2, 8, 32, 16

    key = jax.random.PRNGKey(0)
    kx, kwq, kbq, kwk, kbk, kwv, kbv = jax.random.split(key, 7)

    x = jax.random.normal(kx, (B, S, H), dtype=jnp.float32)
    # nn.Linear(hidden_size, attention_head_size): weight (Dh, H), bias (Dh,)
    bound = 1.0 / math.sqrt(H)
    wq = jax.random.uniform(kwq, (Dh, H), jnp.float32, -bound, bound)
    bq = jax.random.uniform(kbq, (Dh,), jnp.float32, -bound, bound)
    wk = jax.random.uniform(kwk, (Dh, H), jnp.float32, -bound, bound)
    bk = jax.random.uniform(kbk, (Dh,), jnp.float32, -bound, bound)
    wv = jax.random.uniform(kwv, (Dh, H), jnp.float32, -bound, bound)
    bv = jax.random.uniform(kbv, (Dh,), jnp.float32, -bound, bound)

    out, probs = attention_head_forward(x, wq, bq, wk, bk, wv, bv)
    out, probs = jax.block_until_ready((out, probs))

    ref_out, ref_probs = _reference(x, wq, bq, wk, bk, wv, bv)
    assert out.shape == (B, S, Dh) and probs.shape == (B, S, S)
    # bf16 matmul operands (f32 accumulation) -> tolerance at the bf16 level.
    assert jnp.allclose(out, ref_out, atol=3e-2, rtol=3e-2)
    assert jnp.allclose(probs, ref_probs, atol=2e-2, rtol=2e-2)
    assert bool(jnp.all(jnp.isfinite(out))) and bool(jnp.all(jnp.isfinite(probs)))

    print("KERNEL_OK")
</pallas_src>

<mosaic_0001>
module attributes {stable_mosaic.version = 11 : i64} {
  func.func @_attention_head_kernel(%arg0: i32, %arg1: memref<256x128xbf16, #tpu.memory_space<vmem>>, %arg2: memref<128x128xbf16, #tpu.memory_space<vmem>>, %arg3: memref<1x128xf32, #tpu.memory_space<vmem>>, %arg4: memref<128x128xbf16, #tpu.memory_space<vmem>>, %arg5: memref<1x128xf32, #tpu.memory_space<vmem>>, %arg6: memref<128x128xbf16, #tpu.memory_space<vmem>>, %arg7: memref<1x128xf32, #tpu.memory_space<vmem>>, %arg8: memref<2x128x128xf32, #tpu.memory_space<vmem>>, %arg9: memref<2x128x128xf32, #tpu.memory_space<vmem>>) attributes {dimension_semantics = [#tpu.dimension_semantics<parallel>], iteration_bounds = array<i64: 1>, scalar_prefetch = 0 : i64, scratch_operands = 0 : i64, tpu.core_type = #tpu.core_type<tc>, window_params = [{transform_indices = @transform_0, window_bounds = array<i64: 256, 128>}, {pipeline_mode = #tpu.pipeline_mode<synchronous>, transform_indices = @transform_1, window_bounds = array<i64: 128, 128>}, {pipeline_mode = #tpu.pipeline_mode<synchronous>, transform_indices = @transform_2, window_bounds = array<i64: 1, 128>}, {pipeline_mode = #tpu.pipeline_mode<synchronous>, transform_indices = @transform_3, window_bounds = array<i64: 128, 128>}, {pipeline_mode = #tpu.pipeline_mode<synchronous>, transform_indices = @transform_4, window_bounds = array<i64: 1, 128>}, {pipeline_mode = #tpu.pipeline_mode<synchronous>, transform_indices = @transform_5, window_bounds = array<i64: 128, 128>}, {pipeline_mode = #tpu.pipeline_mode<synchronous>, transform_indices = @transform_6, window_bounds = array<i64: 1, 128>}, {transform_indices = @transform_7, window_bounds = array<i64: 2, 128, 128>}, {transform_indices = @transform_8, window_bounds = array<i64: 2, 128, 128>}]} {
    %c0 = arith.constant 0 : index
    %c0_0 = arith.constant 0 : index
    %0 = vector.load %arg1[%c0, %c0_0] : memref<256x128xbf16, #tpu.memory_space<vmem>>, vector<256x128xbf16>
    %c0_1 = arith.constant 0 : index
    %c0_2 = arith.constant 0 : index
    %1 = vector.load %arg2[%c0_1, %c0_2] : memref<128x128xbf16, #tpu.memory_space<vmem>>, vector<128x128xbf16>
    %cst = arith.constant dense<0.000000e+00> : vector<256x128xf32>
    %2 = tpu.matmul %0, %1, %cst {dimension_numbers = #tpu.dot_dimension_numbers<[1], [0], [0], [1], [0, 0, 1, 1], [], []>} : vector<256x128xbf16>, vector<128x128xbf16>, vector<256x128xf32> -> vector<256x128xf32>
    %c0_3 = arith.constant 0 : index
    %c0_4 = arith.constant 0 : index
    %3 = vector.load %arg3[%c0_3, %c0_4] : memref<1x128xf32, #tpu.memory_space<vmem>>, vector<1x128xf32>
    %4 = vector.broadcast %3 : vector<1x128xf32> to vector<256x128xf32>
    %5 = arith.addf %2, %4 : vector<256x128xf32>
    %c0_5 = arith.constant 0 : index
    %c0_6 = arith.constant 0 : index
    %6 = vector.load %arg4[%c0_5, %c0_6] : memref<128x128xbf16, #tpu.memory_space<vmem>>, vector<128x128xbf16>
    %cst_7 = arith.constant dense<0.000000e+00> : vector<256x128xf32>
    %7 = tpu.matmul %0, %6, %cst_7 {dimension_numbers = #tpu.dot_dimension_numbers<[1], [0], [0], [1], [0, 0, 1, 1], [], []>} : vector<256x128xbf16>, vector<128x128xbf16>, vector<256x128xf32> -> vector<256x128xf32>
    %c0_8 = arith.constant 0 : index
    %c0_9 = arith.constant 0 : index
    %8 = vector.load %arg5[%c0_8, %c0_9] : memref<1x128xf32, #tpu.memory_space<vmem>>, vector<1x128xf32>
    %9 = vector.broadcast %8 : vector<1x128xf32> to vector<256x128xf32>
    %10 = arith.addf %7, %9 : vector<256x128xf32>
    %c0_10 = arith.constant 0 : index
    %c0_11 = arith.constant 0 : index
    %11 = vector.load %arg6[%c0_10, %c0_11] : memref<128x128xbf16, #tpu.memory_space<vmem>>, vector<128x128xbf16>
    %cst_12 = arith.constant dense<0.000000e+00> : vector<256x128xf32>
    %12 = tpu.matmul %0, %11, %cst_12 {dimension_numbers = #tpu.dot_dimension_numbers<[1], [0], [0], [1], [0, 0, 1, 1], [], []>} : vector<256x128xbf16>, vector<128x128xbf16>, vector<256x128xf32> -> vector<256x128xf32>
    %c0_13 = arith.constant 0 : index
    %c0_14 = arith.constant 0 : index
    %13 = vector.load %arg7[%c0_13, %c0_14] : memref<1x128xf32, #tpu.memory_space<vmem>>, vector<1x128xf32>
    %14 = vector.broadcast %13 : vector<1x128xf32> to vector<256x128xf32>
    %15 = arith.addf %12, %14 : vector<256x128xf32>
    %16 = vector.shape_cast %5 : vector<256x128xf32> to vector<2x128x128xf32>
    %17 = vector.shape_cast %10 : vector<256x128xf32> to vector<2x128x128xf32>
    %18 = vector.shape_cast %15 : vector<256x128xf32> to vector<2x128x128xf32>
    %19 = arith.truncf %16 : vector<2x128x128xf32> to vector<2x128x128xbf16>
    %20 = arith.truncf %17 : vector<2x128x128xf32> to vector<2x128x128xbf16>
    %cst_15 = arith.constant dense<0.000000e+00> : vector<2x128x128xf32>
    %21 = tpu.matmul %19, %20, %cst_15 {dimension_numbers = #tpu.dot_dimension_numbers<[2], [2], [1], [1], [0, 0, 0, 1, 1, 1], [0], [0]>} : vector<2x128x128xbf16>, vector<2x128x128xbf16>, vector<2x128x128xf32> -> vector<2x128x128xf32>
    %22 = tpu.iota {dimensions = array<i32: 2>} : vector<1x1x128xi32>
    %c8_i32 = arith.constant 8 : i32
    %23 = vector.broadcast %c8_i32 : i32 to vector<1x1x128xi32>
    %24 = arith.cmpi slt, %22, %23 : vector<1x1x128xi32>
    %cst_16 = arith.constant -1.000000e+30 : f32
    %25 = vector.shape_cast %24 : vector<1x1x128xi1> to vector<1x1x128xi1>
    %26 = vector.broadcast %25 : vector<1x1x128xi1> to vector<2x128x128xi1>
    %27 = vector.broadcast %cst_16 : f32 to vector<2x128x128xf32>
    %28 = arith.select %26, %21, %27 : vector<2x128x128xi1>, vector<2x128x128xf32>
    %cst_17 = arith.constant dense<0xFF800000> : vector<2x128xf32>
    %29 = vector.multi_reduction <maximumf>, %28, %cst_17 [2] : vector<2x128x128xf32> to vector<2x128xf32>
    %30 = vector.shape_cast %29 : vector<2x128xf32> to vector<2x128x1xf32>
    %31 = vector.broadcast %30 : vector<2x128x1xf32> to vector<2x128x128xf32>
    %32 = arith.subf %28, %31 : vector<2x128x128xf32>
    %33 = math.exp %32 : vector<2x128x128xf32>
    %cst_18 = arith.constant dense<0.000000e+00> : vector<2x128xf32>
    %34 = vector.multi_reduction <add>, %33, %cst_18 [2] : vector<2x128x128xf32> to vector<2x128xf32>
    %35 = vector.shape_cast %34 : vector<2x128xf32> to vector<2x128x1xf32>
    %36 = tpu.reciprocal %35 {approx = true} : vector<2x128x1xf32> -> vector<2x128x1xf32>
    %37 = vector.broadcast %36 : vector<2x128x1xf32> to vector<2x128x128xf32>
    %38 = arith.mulf %33, %37 : vector<2x128x128xf32>
    %39 = arith.truncf %38 : vector<2x128x128xf32> to vector<2x128x128xbf16>
    %40 = arith.truncf %18 : vector<2x128x128xf32> to vector<2x128x128xbf16>
    %cst_19 = arith.constant dense<0.000000e+00> : vector<2x128x128xf32>
    %41 = tpu.matmul %39, %40, %cst_19 {dimension_numbers = #tpu.dot_dimension_numbers<[2], [1], [1], [2], [0, 0, 0, 1, 1, 2], [0], [0]>} : vector<2x128x128xbf16>, vector<2x128x128xbf16>, vector<2x128x128xf32> -> vector<2x128x128xf32>
    %c0_20 = arith.constant 0 : index
    %c0_21 = arith.constant 0 : index
    %c0_22 = arith.constant 0 : index
    %42 = vector.load %arg8[%c0_20, %c0_21, %c0_22] : memref<2x128x128xf32, #tpu.memory_space<vmem>>, vector<2x128x128xf32>
    tpu.vector_store %arg8[%c0_20, %c0_21, %c0_22], %41 {strides = array<i32>} : memref<2x128x128xf32, #tpu.memory_space<vmem>>, vector<2x128x128xf32>,
    %c0_23 = arith.constant 0 : index
    %c0_24 = arith.constant 0 : index
    %c0_25 = arith.constant 0 : index
    %43 = vector.load %arg9[%c0_23, %c0_24, %c0_25] : memref<2x128x128xf32, #tpu.memory_space<vmem>>, vector<2x128x128xf32>
    tpu.vector_store %arg9[%c0_23, %c0_24, %c0_25], %38 {strides = array<i32>} : memref<2x128x128xf32, #tpu.memory_space<vmem>>, vector<2x128x128xf32>,
    return
  }
  func.func @transform_0(%arg0: i32) -> (i32, i32) {
    %c0_i32 = arith.constant 0 : i32
    %c0_i32_0 = arith.constant 0 : i32
    return %arg0, %c0_i32 : i32, i32
  }
  func.func @transform_1(%arg0: i32) -> (i32, i32) {
    %c0_i32 = arith.constant 0 : i32
    %c0_i32_0 = arith.constant 0 : i32
    %c0_i32_1 = arith.constant 0 : i32
    return %c0_i32, %c0_i32_0 : i32, i32
  }
  func.func @transform_2(%arg0: i32) -> (i32, i32) {
    %c0_i32 = arith.constant 0 : i32
    %c0_i32_0 = arith.constant 0 : i32
    %c0_i32_1 = arith.constant 0 : i32
    return %c0_i32, %c0_i32_0 : i32, i32
  }
  func.func @transform_3(%arg0: i32) -> (i32, i32) {
    %c0_i32 = arith.constant 0 : i32
    %c0_i32_0 = arith.constant 0 : i32
    %c0_i32_1 = arith.constant 0 : i32
    return %c0_i32, %c0_i32_0 : i32, i32
  }
  func.func @transform_4(%arg0: i32) -> (i32, i32) {
    %c0_i32 = arith.constant 0 : i32
    %c0_i32_0 = arith.constant 0 : i32
    %c0_i32_1 = arith.constant 0 : i32
    return %c0_i32, %c0_i32_0 : i32, i32
  }
  func.func @transform_5(%arg0: i32) -> (i32, i32) {
    %c0_i32 = arith.constant 0 : i32
    %c0_i32_0 = arith.constant 0 : i32
    %c0_i32_1 = arith.constant 0 : i32
    return %c0_i32, %c0_i32_0 : i32, i32
  }
  func.func @transform_6(%arg0: i32) -> (i32, i32) {
    %c0_i32 = arith.constant 0 : i32
    %c0_i32_0 = arith.constant 0 : i32
    %c0_i32_1 = arith.constant 0 : i32
    return %c0_i32, %c0_i32_0 : i32, i32
  }
  func.func @transform_7(%arg0: i32) -> (i32, i32, i32) {
    %c0_i32 = arith.constant 0 : i32
    %c0_i32_0 = arith.constant 0 : i32
    %c0_i32_1 = arith.constant 0 : i32
    return %arg0, %c0_i32, %c0_i32_0 : i32, i32, i32
  }
  func.func @transform_8(%arg0: i32) -> (i32, i32, i32) {
    %c0_i32 = arith.constant 0 : i32
    %c0_i32_0 = arith.constant 0 : i32
    %c0_i32_1 = arith.constant 0 : i32
    return %arg0, %c0_i32, %c0_i32_0 : i32, i32, i32
  }
}

</mosaic_0001>

<llo_original>
// kernel: tpu_custom_call.1
$region0: #{tpu_custom_call.1}
  #allocation0 [shape = 'u32[]', space=smem, size = 0x4, offset = 0x4, fixed_abs, tag = 'smem constant byte address 0x4 - core index']
  #allocation1 [shape = 'u32[72,128]{1,0:T(1,128)}', space=vmem, size = 0x9000, scoped, tag = 'internal scratch']
  %s0 = inlined_call_operand.hbm [shape: bf16[256,128], index: 0, kind: input, shape index: {}]
  %s1 = inlined_call_operand.hbm [shape: bf16[128,128], index: 1, kind: input, shape index: {}]
  %s2 = inlined_call_operand.vmem [shape: f32[1,128], index: 2, kind: input, shape index: {}]
  %s3 = inlined_call_operand.hbm [shape: bf16[128,128], index: 3, kind: input, shape index: {}]
  %s4 = inlined_call_operand.vmem [shape: f32[1,128], index: 4, kind: input, shape index: {}]
  %s5 = inlined_call_operand.hbm [shape: bf16[128,128], index: 5, kind: input, shape index: {}]
  %s6 = inlined_call_operand.vmem [shape: f32[1,128], index: 6, kind: input, shape index: {}]
  %s7 = inlined_call_operand.hbm [shape: f32[2,128,128], index: 7, kind: output, shape index: {0}]
  %s8 = inlined_call_operand.hbm [shape: f32[2,128,128], index: 8, kind: output, shape index: {1}]
  %9 = xla_tuple %s7, %s8
  %s10 = sld [smem:[#allocation0]]
  $region62: #{tpu_custom_call.1} parent=0
    _
  %s12 = ssub.s32 1, %s10
  %s13 = scalar_select 0, %s12, %s10
  $region1: #{tpu_custom_call.1} parent=0
    #allocation2 [shape = 'u8[65536]{0}', space=vmem, size = 0x10000, scoped, tag = 'input window, operand 0, single buffered']
    #allocation3 [shape = 's32[1]{0}', space=sflag, size = 0x4, scoped, tag = 'scoped memory for tpu_custom_call.1']
    #allocation4 [shape = 's32[1]{0}', space=sflag, size = 0x4, scoped, tag = 'scoped memory for tpu_custom_call.1']
    #allocation5 [shape = 'u8[32768]{0}', space=vmem, size = 0x8000, scoped, tag = 'input window, operand 1, single buffered']
    #allocation6 [shape = 's32[1]{0}', space=sflag, size = 0x4, scoped, tag = 'scoped memory for tpu_custom_call.1']
    #allocation7 [shape = 'u8[32768]{0}', space=vmem, size = 0x8000, scoped, tag = 'input window, operand 3, single buffered']
    #allocation8 [shape = 'u8[32768]{0}', space=vmem, size = 0x8000, scoped, tag = 'input window, operand 5, single buffered']
    #allocation9 [shape = 's32[1]{0}', space=sflag, size = 0x4, scoped, tag = 'scoped memory for tpu_custom_call.1']
    #allocation10 [shape = 'u8[131072]{0}', space=vmem, size = 0x20000, scoped, tag = 'output window, operand 0, single buffered']
    #allocation11 [shape = 'u8[131072]{0}', space=vmem, size = 0x20000, scoped, tag = 'output window, operand 1, single buffered']
    #allocation12 [shape = 's32[1]{0}', space=sflag, size = 0x4, scoped, tag = 'scoped memory for tpu_custom_call.1']
    %14 = vsyncpa [#allocation3], 0
    %15 = vsyncpa [#allocation6], 0
    %16 = vsyncpa [#allocation9], 0
    %17 = vsyncpa [#allocation4], 0
    %18 = vsyncpa [#allocation12], 0
    // Predicated region
    $region2: #{tpu_custom_call.1} parent=1 // pred_check
      _
    $region3: #{tpu_custom_call.1} parent=1 // pred_check_branch
      %20 = sbr.rel (0) target = $region5
    $region4: #{tpu_custom_call.1} parent=1 // pred_region
      %22 = vsyncadd [#allocation3], 0
      %s23 = sshll.u32 %s0, 4
      %s24 = int_to_ptr.hbm [resolvable:$true] %s23
      %s25 = sshll.u32 [#allocation2], 4
      %s26 = int_to_ptr.vmem [resolvable:$true] %s25
      %31 = dma.hbm_to_vmem [thread:$0]  %s24, 2048, %s26, [#allocation3], 64, 64, 4
    $region5: #{tpu_custom_call.1} parent=1 // pred_fallthru
      _
    // Predicated region
    $region6: #{tpu_custom_call.1} parent=1 // pred_check
      _
    $region7: #{tpu_custom_call.1} parent=1 // pred_check_branch
      %33 = sbr.rel (0) target = $region9
    $region8: #{tpu_custom_call.1} parent=1 // pred_region
      %35 = vsyncadd [#allocation6], 0
      %s36 = sshll.u32 %s1, 4
      %s37 = int_to_ptr.hbm [resolvable:$true] %s36
      %s38 = sshll.u32 [#allocation5], 4
      %s39 = int_to_ptr.vmem [resolvable:$true] %s38
      %44 = dma.hbm_to_vmem [thread:$0]  %s37, 1024, %s39, [#allocation6], 64, 64, 4
    $region9: #{tpu_custom_call.1} parent=1 // pred_fallthru
      _
    // Predicated region
    $region10: #{tpu_custom_call.1} parent=1 // pred_check
      _
    $region11: #{tpu_custom_call.1} parent=1 // pred_check_branch
      %46 = sbr.rel (0) target = $region13
    $region12: #{tpu_custom_call.1} parent=1 // pred_region
      _
    $region13: #{tpu_custom_call.1} parent=1 // pred_fallthru
      _
    // Predicated region
    $region14: #{tpu_custom_call.1} parent=1 // pred_check
      _
    $region15: #{tpu_custom_call.1} parent=1 // pred_check_branch
      %48 = sbr.rel (0) target = $region17
    $region16: #{tpu_custom_call.1} parent=1 // pred_region
      %50 = vsyncadd [#allocation6], 0
      %s51 = sshll.u32 %s3, 4
      %s52 = int_to_ptr.hbm [resolvable:$true] %s51
      %s53 = sshll.u32 [#allocation7], 4
      %s54 = int_to_ptr.vmem [resolvable:$true] %s53
      %59 = dma.hbm_to_vmem [thread:$0]  %s52, 1024, %s54, [#allocation6], 64, 64, 4
    $region17: #{tpu_custom_call.1} parent=1 // pred_fallthru
      _
    // Predicated region
    $region18: #{tpu_custom_call.1} parent=1 // pred_check
      _
    $region19: #{tpu_custom_call.1} parent=1 // pred_check_branch
      %61 = sbr.rel (0) target = $region21
    $region20: #{tpu_custom_call.1} parent=1 // pred_region
      _
    $region21: #{tpu_custom_call.1} parent=1 // pred_fallthru
      _
    // Predicated region
    $region22: #{tpu_custom_call.1} parent=1 // pred_check
      _
    $region23: #{tpu_custom_call.1} parent=1 // pred_check_branch
      %63 = sbr.rel (0) target = $region25
    $region24: #{tpu_custom_call.1} parent=1 // pred_region
      %65 = vsyncadd [#allocation9], 0
      %s66 = sshll.u32 %s5, 4
      %s67 = int_to_ptr.hbm [resolvable:$true] %s66
      %s68 = sshll.u32 [#allocation8], 4
      %s69 = int_to_ptr.vmem [resolvable:$true] %s68
      %74 = dma.hbm_to_vmem [thread:$0]  %s67, 1024, %s69, [#allocation9], 64, 64, 4
    $region25: #{tpu_custom_call.1} parent=1 // pred_fallthru
      _
    // Predicated region
    $region26: #{tpu_custom_call.1} parent=1 // pred_check
      _
    $region27: #{tpu_custom_call.1} parent=1 // pred_check_branch
      %76 = sbr.rel (0) target = $region29
    $region28: #{tpu_custom_call.1} parent=1 // pred_region
      _
    $region29: #{tpu_custom_call.1} parent=1 // pred_fallthru
      _
    // Predicated region
    $region30: #{tpu_custom_call.1} parent=1 // pred_check
      _
    $region31: #{tpu_custom_call.1} parent=1 // pred_check_branch
      %78 = sbr.rel (0) target = $region33
    $region32: #{tpu_custom_call.1} parent=1 // pred_region
      %80 = dma.done [#allocation3], 2048
    $region33: #{tpu_custom_call.1} parent=1 // pred_fallthru
      _
    // Predicated region
    $region34: #{tpu_custom_call.1} parent=1 // pred_check
      _
    $region35: #{tpu_custom_call.1} parent=1 // pred_check_branch
      %82 = sbr.rel (0) target = $region37
    $region36: #{tpu_custom_call.1} parent=1 // pred_region
      %84 = dma.done [#allocation6], 1024
    $region37: #{tpu_custom_call.1} parent=1 // pred_fallthru
      _
    // Predicated region
    $region38: #{tpu_custom_call.1} parent=1 // pred_check
      _
    $region39: #{tpu_custom_call.1} parent=1 // pred_check_branch
      %86 = sbr.rel (0) target = $region41
    $region40: #{tpu_custom_call.1} parent=1 // pred_region
      %88 = dma.done [#allocation6], 1024
    $region41: #{tpu_custom_call.1} parent=1 // pred_fallthru
      _
    // Predicated region
    $region42: #{tpu_custom_call.1} parent=1 // pred_check
      _
    $region43: #{tpu_custom_call.1} parent=1 // pred_check_branch
      %90 = sbr.rel (0) target = $region45
    $region44: #{tpu_custom_call.1} parent=1 // pred_region
      %92 = dma.done [#allocation9], 1024
    $region45: #{tpu_custom_call.1} parent=1 // pred_fallthru
      _
    %v93 = vld [vmem:[#allocation2] sm:$0xf]
    %v94 = vld [vmem:[#allocation2 + $0x4] sm:$0xf]
    %v95 = vld [vmem:[#allocation2 + $0x8] sm:$0xf]
    %v96 = vld [vmem:[#allocation2 + $0xc] sm:$0xf]
    %v97 = vld [vmem:[#allocation2 + $0x10] sm:$0xf]
    %v98 = vld [vmem:[#allocation2 + $0x14] sm:$0xf]
    %v99 = vld [vmem:[#allocation2 + $0x18] sm:$0xf]
    %v100 = vld [vmem:[#allocation2 + $0x1c] sm:$0xf]
    %v101 = vld [vmem:[#allocation2 + $0x20] sm:$0xf]
    %v102 = vld [vmem:[#allocation2 + $0x24] sm:$0xf]
    %v103 = vld [vmem:[#allocation2 + $0x28] sm:$0xf]
    %v104 = vld [vmem:[#allocation2 + $0x2c] sm:$0xf]
    %v105 = vld [vmem:[#allocation2 + $0x30] sm:$0xf]
    %v106 = vld [vmem:[#allocation2 + $0x34] sm:$0xf]
    %v107 = vld [vmem:[#allocation2 + $0x38] sm:$0xf]
    %v108 = vld [vmem:[#allocation2 + $0x3c] sm:$0xf]
    %v109 = vld [vmem:[#allocation2 + $0x40] sm:$0xf]
    %v110 = vld [vmem:[#allocation2 + $0x44] sm:$0xf]
    %v111 = vld [vmem:[#allocation2 + $0x48] sm:$0xf]
    %v112 = vld [vmem:[#allocation2 + $0x4c] sm:$0xf]
    %v113 = vld [vmem:[#allocation2 + $0x50] sm:$0xf]
    %v114 = vld [vmem:[#allocation2 + $0x54] sm:$0xf]
    %v115 = vld [vmem:[#allocation2 + $0x58] sm:$0xf]
    %v116 = vld [vmem:[#allocation2 + $0x5c] sm:$0xf]
    %v117 = vld [vmem:[#allocation2 + $0x60] sm:$0xf]
    %v118 = vld [vmem:[#allocation2 + $0x64] sm:$0xf]
    %v119 = vld [vmem:[#allocation2 + $0x68] sm:$0xf]
    %v120 = vld [vmem:[#allocation2 + $0x6c] sm:$0xf]
    %v121 = vld [vmem:[#allocation2 + $0x70] sm:$0xf]
    %v122 = vld [vmem:[#allocation2 + $0x74] sm:$0xf]
    %v123 = vld [vmem:[#allocation2 + $0x78] sm:$0xf]
    %v124 = vld [vmem:[#allocation2 + $0x7c] sm:$0xf]
    %v125 = vld [vmem:[#allocation5] sm:$0xf]
    %v126 = vld [vmem:[#allocation5 + $0x4] sm:$0xf]
    %v127 = vld [vmem:[#allocation5 + $0x8] sm:$0xf]
    %v128 = vld [vmem:[#allocation5 + $0xc] sm:$0xf]
    %v129 = vld [vmem:[#allocation5 + $0x10] sm:$0xf]
    %v130 = vld [vmem:[#allocation5 + $0x14] sm:$0xf]
    %v131 = vld [vmem:[#allocation5 + $0x18] sm:$0xf]
    %v132 = vld [vmem:[#allocation5 + $0x1c] sm:$0xf]
    %v133 = vld [vmem:[#allocation5 + $0x20] sm:$0xf]
    %v134 = vld [vmem:[#allocation5 + $0x24] sm:$0xf]
    %v135 = vld [vmem:[#allocation5 + $0x28] sm:$0xf]
    %v136 = vld [vmem:[#allocation5 + $0x2c] sm:$0xf]
    %v137 = vld [vmem:[#allocation5 + $0x30] sm:$0xf]
    %v138 = vld [vmem:[#allocation5 + $0x34] sm:$0xf]
    %v139 = vld [vmem:[#allocation5 + $0x38] sm:$0xf]
    %v140 = vld [vmem:[#allocation5 + $0x3c] sm:$0xf]
    %v141 = vld [vmem:[%s2] sm:$0x1]
    %v143 = vperm.slane %v141, 0
    %v177 = vunpack.c.l.b16 %v93
    %v178 = vunpack.c.l.b16 %v94
    %v179 = vunpack.c.l.b16 %v95
    %v180 = vunpack.c.l.b16 %v96
    %v181 = vunpack.c.l.b16 %v97
    %v182 = vunpack.c.l.b16 %v98
    %v183 = vunpack.c.l.b16 %v99
    %v184 = vunpack.c.l.b16 %v100
    %v185 = vunpack.c.l.b16 %v101
    %v186 = vunpack.c.l.b16 %v102
    %v187 = vunpack.c.l.b16 %v103
    %v188 = vunpack.c.l.b16 %v104
    %v189 = vunpack.c.l.b16 %v105
    %v190 = vunpack.c.l.b16 %v106
    %v191 = vunpack.c.l.b16 %v107
    %v192 = vunpack.c.l.b16 %v108
    %v193 = vunpack.c.l.b16 %v109
    %v194 = vunpack.c.l.b16 %v110
    %v195 = vunpack.c.l.b16 %v111
    %v196 = vunpack.c.l.b16 %v112
    %v197 = vunpack.c.l.b16 %v113
    %v198 = vunpack.c.l.b16 %v114
    %v199 = vunpack.c.l.b16 %v115
    %v200 = vunpack.c.l.b16 %v116
    %v201 = vunpack.c.l.b16 %v117
    %v202 = vunpack.c.l.b16 %v118
    %v203 = vunpack.c.l.b16 %v119
    %v204 = vunpack.c.l.b16 %v120
    %v205 = vunpack.c.l.b16 %v121
    %v206 = vunpack.c.l.b16 %v122
    %v207 = vunpack.c.l.b16 %v123
    %v208 = vunpack.c.l.b16 %v124
    %v209 = vpack.c.b16 %v178, %v177
    %v210 = vpack.c.b16 %v180, %v179
    %v211 = vpack.c.b16 %v182, %v181
    %v212 = vpack.c.b16 %v184, %v183
    %v213 = vpack.c.b16 %v186, %v185
    %v214 = vpack.c.b16 %v188, %v187
    %v215 = vpack.c.b16 %v190, %v189
    %v216 = vpack.c.b16 %v192, %v191
    %v217 = vpack.c.b16 %v194, %v193
    %v218 = vpack.c.b16 %v196, %v195
    %v219 = vpack.c.b16 %v198, %v197
    %v220 = vpack.c.b16 %v200, %v199
    %v221 = vpack.c.b16 %v202, %v201
    %v222 = vpack.c.b16 %v204, %v203
    %v223 = vpack.c.b16 %v206, %v205
    %v224 = vpack.c.b16 %v208, %v207
    %v257 = vunpack.c.l.b16 %v125
    %v258 = vunpack.c.l.b16 %v126
    %v259 = vunpack.c.l.b16 %v127
    %v260 = vunpack.c.l.b16 %v128
    %v261 = vunpack.c.l.b16 %v129
    %v262 = vunpack.c.l.b16 %v130
    %v263 = vunpack.c.l.b16 %v131
    %v264 = vunpack.c.l.b16 %v132
    %v265 = vunpack.c.l.b16 %v133
    %v266 = vunpack.c.l.b16 %v134
    %v267 = vunpack.c.l.b16 %v135
    %v268 = vunpack.c.l.b16 %v136
    %v269 = vunpack.c.l.b16 %v137
    %v270 = vunpack.c.l.b16 %v138
    %v271 = vunpack.c.l.b16 %v139
    %v272 = vunpack.c.l.b16 %v140
    %v273 = vpack.c.b16 %v258, %v257
    %v274 = vpack.c.b16 %v260, %v259
    %v275 = vpack.c.b16 %v262, %v261
    %v276 = vpack.c.b16 %v264, %v263
    %v277 = vpack.c.b16 %v266, %v265
    %v278 = vpack.c.b16 %v268, %v267
    %v279 = vpack.c.b16 %v270, %v269
    %v280 = vpack.c.b16 %v272, %v271
    %289 = vmatpush.bf16.msra.mxu0 %v280
    %290 = vmatpush.bf16.msra.mxu0 %v279
    %291 = vmatpush.bf16.msra.mxu0 %v278
    %292 = vmatpush.bf16.msra.mxu0 %v277
    %293 = vmatpush.bf16.msra.mxu0 %v276
    %294 = vmatpush.bf16.msra.mxu0 %v275
    %295 = vmatpush.bf16.msra.mxu0 %v274
    %296 = vmatpush.bf16.msra.mxu0 %v273
    %297 = vmatmul.bf16.gmra.mxu0 %v209
    %v298 = vpop.f32.mrf.mxu0
    %v299 = vadd.f32 %v143, %v298
    %v300 = vpop.f32.mrf.mxu0
    %v301 = vadd.f32 %v143, %v300
    %302 = vmatmul.bf16.gmra.mxu0 %v210
    %v303 = vpop.f32.mrf.mxu0
    %v304 = vadd.f32 %v143, %v303
    %v305 = vpop.f32.mrf.mxu0
    %v306 = vadd.f32 %v143, %v305
    %307 = vmatmul.bf16.gmra.mxu0 %v211
    %v308 = vpop.f32.mrf.mxu0
    %v309 = vadd.f32 %v143, %v308
    %v310 = vpop.f32.mrf.mxu0
    %v311 = vadd.f32 %v143, %v310
    %312 = vmatmul.bf16.gmra.mxu0 %v212
    %v313 = vpop.f32.mrf.mxu0
    %v314 = vadd.f32 %v143, %v313
    %v315 = vpop.f32.mrf.mxu0
    %v316 = vadd.f32 %v143, %v315
    %317 = vmatmul.bf16.gmra.mxu0 %v213
    %v318 = vpop.f32.mrf.mxu0
    %v319 = vadd.f32 %v143, %v318
    %v320 = vpop.f32.mrf.mxu0
    %v321 = vadd.f32 %v143, %v320
    %322 = vmatmul.bf16.gmra.mxu0 %v214
    %v323 = vpop.f32.mrf.mxu0
    %v324 = vadd.f32 %v143, %v323
    %v325 = vpop.f32.mrf.mxu0
    %v326 = vadd.f32 %v143, %v325
    %327 = vmatmul.bf16.gmra.mxu0 %v215
    %v328 = vpop.f32.mrf.mxu0
    %v329 = vadd.f32 %v143, %v328
    %v330 = vpop.f32.mrf.mxu0
    %v331 = vadd.f32 %v143, %v330
    %332 = vmatmul.bf16.gmra.mxu0 %v216
    %v333 = vpop.f32.mrf.mxu0
    %v334 = vadd.f32 %v143, %v333
    %v335 = vpop.f32.mrf.mxu0
    %v336 = vadd.f32 %v143, %v335
    %337 = vmatmul.bf16.gmra.mxu0 %v217
    %v338 = vpop.f32.mrf.mxu0
    %v339 = vadd.f32 %v143, %v338
    %v340 = vpop.f32.mrf.mxu0
    %v341 = vadd.f32 %v143, %v340
    %342 = vmatmul.bf16.gmra.mxu0 %v218
    %v343 = vpop.f32.mrf.mxu0
    %v344 = vadd.f32 %v143, %v343
    %v345 = vpop.f32.mrf.mxu0
    %v346 = vadd.f32 %v143, %v345
    %347 = vmatmul.bf16.gmra.mxu0 %v219
    %v348 = vpop.f32.mrf.mxu0
    %v349 = vadd.f32 %v143, %v348
    %v350 = vpop.f32.mrf.mxu0
    %v351 = vadd.f32 %v143, %v350
    %352 = vmatmul.bf16.gmra.mxu0 %v220
    %v353 = vpop.f32.mrf.mxu0
    %v354 = vadd.f32 %v143, %v353
    %v355 = vpop.f32.mrf.mxu0
    %v356 = vadd.f32 %v143, %v355
    %357 = vmatmul.bf16.gmra.mxu0 %v221
    %v358 = vpop.f32.mrf.mxu0
    %v359 = vadd.f32 %v143, %v358
    %v360 = vpop.f32.mrf.mxu0
    %v361 = vadd.f32 %v143, %v360
    %362 = vmatmul.bf16.gmra.mxu0 %v222
    %v363 = vpop.f32.mrf.mxu0
    %v364 = vadd.f32 %v143, %v363
    %v365 = vpop.f32.mrf.mxu0
    %v366 = vadd.f32 %v143, %v365
    %367 = vmatmul.bf16.gmra.mxu0 %v223
    %v368 = vpop.f32.mrf.mxu0
    %v369 = vadd.f32 %v143, %v368
    %v370 = vpop.f32.mrf.mxu0
    %v371 = vadd.f32 %v143, %v370
    %372 = vmatmul.bf16.gmra.mxu0 %v224
    %v373 = vpop.f32.mrf.mxu0
    %v374 = vadd.f32 %v143, %v373
    %v375 = vpop.f32.mrf.mxu0
    %v376 = vadd.f32 %v143, %v375
    %377 = vdwg.mxu0
    %v378 = vld [vmem:[#allocation7] sm:$0xf]
    %v379 = vld [vmem:[#allocation7 + $0x4] sm:$0xf]
    %v380 = vld [vmem:[#allocation7 + $0x8] sm:$0xf]
    %v381 = vld [vmem:[#allocation7 + $0xc] sm:$0xf]
    %v382 = vld [vmem:[#allocation7 + $0x10] sm:$0xf]
    %v383 = vld [vmem:[#allocation7 + $0x14] sm:$0xf]
    %v384 = vld [vmem:[#allocation7 + $0x18] sm:$0xf]
    %v385 = vld [vmem:[#allocation7 + $0x1c] sm:$0xf]
    %v386 = vld [vmem:[#allocation7 + $0x20] sm:$0xf]
    %v387 = vld [vmem:[#allocation7 + $0x24] sm:$0xf]
    %v388 = vld [vmem:[#allocation7 + $0x28] sm:$0xf]
    %v389 = vld [vmem:[#allocation7 + $0x2c] sm:$0xf]
    %v390 = vld [vmem:[#allocation7 + $0x30] sm:$0xf]
    %v391 = vld [vmem:[#allocation7 + $0x34] sm:$0xf]
    %v392 = vld [vmem:[#allocation7 + $0x38] sm:$0xf]
    %v393 = vld [vmem:[#allocation7 + $0x3c] sm:$0xf]
    %v394 = vld [vmem:[%s4] sm:$0x1]
    %v396 = vperm.slane %v394, 0
    %v414 = vunpack.c.l.b16 %v378
    %v415 = vunpack.c.l.b16 %v379
    %v416 = vunpack.c.l.b16 %v380
    %v417 = vunpack.c.l.b16 %v381
    %v418 = vunpack.c.l.b16 %v382
    %v419 = vunpack.c.l.b16 %v383
    %v420 = vunpack.c.l.b16 %v384
    %v421 = vunpack.c.l.b16 %v385
    %v422 = vunpack.c.l.b16 %v386
    %v423 = vunpack.c.l.b16 %v387
    %v424 = vunpack.c.l.b16 %v388
    %v425 = vunpack.c.l.b16 %v389
    %v426 = vunpack.c.l.b16 %v390
    %v427 = vunpack.c.l.b16 %v391
    %v428 = vunpack.c.l.b16 %v392
    %v429 = vunpack.c.l.b16 %v393
    %v430 = vpack.c.b16 %v415, %v414
    %v431 = vpack.c.b16 %v417, %v416
    %v432 = vpack.c.b16 %v419, %v418
    %v433 = vpack.c.b16 %v421, %v420
    %v434 = vpack.c.b16 %v423, %v422
    %v435 = vpack.c.b16 %v425, %v424
    %v436 = vpack.c.b16 %v427, %v426
    %v437 = vpack.c.b16 %v429, %v428
    %446 = vmatpush.bf16.msra.mxu0 %v437
    %447 = vmatpush.bf16.msra.mxu0 %v436
    %448 = vmatpush.bf16.msra.mxu0 %v435
    %449 = vmatpush.bf16.msra.mxu0 %v434
    %450 = vmatpush.bf16.msra.mxu0 %v433
    %451 = vmatpush.bf16.msra.mxu0 %v432
    %452 = vmatpush.bf16.msra.mxu0 %v431
    %453 = vmatpush.bf16.msra.mxu0 %v430
    %454 = vmatmul.bf16.gmra.mxu0 %v209
    %v455 = vpop.f32.mrf.mxu0
    %v456 = vadd.f32 %v396, %v455
    %v457 = vpop.f32.mrf.mxu0
    %v458 = vadd.f32 %v396, %v457
    %459 = vmatmul.bf16.gmra.mxu0 %v210
    %v460 = vpop.f32.mrf.mxu0
    %v461 = vadd.f32 %v396, %v460
    %v462 = vpop.f32.mrf.mxu0
    %v463 = vadd.f32 %v396, %v462
    %464 = vmatmul.bf16.gmra.mxu0 %v211
    %v465 = vpop.f32.mrf.mxu0
    %v466 = vadd.f32 %v396, %v465
    %v467 = vpop.f32.mrf.mxu0
    %v468 = vadd.f32 %v396, %v467
    %469 = vmatmul.bf16.gmra.mxu0 %v212
    %v470 = vpop.f32.mrf.mxu0
    %v471 = vadd.f32 %v396, %v470
    %v472 = vpop.f32.mrf.mxu0
    %v473 = vadd.f32 %v396, %v472
    %474 = vmatmul.bf16.gmra.mxu0 %v213
    %v475 = vpop.f32.mrf.mxu0
    %v476 = vadd.f32 %v396, %v475
    %v477 = vpop.f32.mrf.mxu0
    %v478 = vadd.f32 %v396, %v477
    %479 = vmatmul.bf16.gmra.mxu0 %v214
    %v480 = vpop.f32.mrf.mxu0
    %v481 = vadd.f32 %v396, %v480
    %v482 = vpop.f32.mrf.mxu0
    %v483 = vadd.f32 %v396, %v482
    %484 = vmatmul.bf16.gmra.mxu0 %v215
    %v485 = vpop.f32.mrf.mxu0
    %v486 = vadd.f32 %v396, %v485
    %v487 = vpop.f32.mrf.mxu0
    %v488 = vadd.f32 %v396, %v487
    %489 = vmatmul.bf16.gmra.mxu0 %v216
    %v490 = vpop.f32.mrf.mxu0
    %v491 = vadd.f32 %v396, %v490
    %v492 = vpop.f32.mrf.mxu0
    %v493 = vadd.f32 %v396, %v492
    %494 = vmatmul.bf16.gmra.mxu0 %v217
    %v495 = vpop.f32.mrf.mxu0
    %v496 = vadd.f32 %v396, %v495
    %v497 = vpop.f32.mrf.mxu0
    %v498 = vadd.f32 %v396, %v497
    %499 = vmatmul.bf16.gmra.mxu0 %v218
    %v500 = vpop.f32.mrf.mxu0
    %v501 = vadd.f32 %v396, %v500
    %v502 = vpop.f32.mrf.mxu0
    %v503 = vadd.f32 %v396, %v502
    %504 = vmatmul.bf16.gmra.mxu0 %v219
    %v505 = vpop.f32.mrf.mxu0
    %v506 = vadd.f32 %v396, %v505
    %v507 = vpop.f32.mrf.mxu0
    %v508 = vadd.f32 %v396, %v507
    %509 = vmatmul.bf16.gmra.mxu0 %v220
    %v510 = vpop.f32.mrf.mxu0
    %v511 = vadd.f32 %v396, %v510
    %v512 = vpop.f32.mrf.mxu0
    %v513 = vadd.f32 %v396, %v512
    %514 = vmatmul.bf16.gmra.mxu0 %v221
    %v515 = vpop.f32.mrf.mxu0
    %v516 = vadd.f32 %v396, %v515
    %v517 = vpop.f32.mrf.mxu0
    %v518 = vadd.f32 %v396, %v517
    %519 = vmatmul.bf16.gmra.mxu0 %v222
    %v520 = vpop.f32.mrf.mxu0
    %v521 = vadd.f32 %v396, %v520
    %v522 = vpop.f32.mrf.mxu0
    %v523 = vadd.f32 %v396, %v522
    %524 = vmatmul.bf16.gmra.mxu0 %v223
    %v525 = vpop.f32.mrf.mxu0
    %v526 = vadd.f32 %v396, %v525
    %v527 = vpop.f32.mrf.mxu0
    %v528 = vadd.f32 %v396, %v527
    %529 = vmatmul.bf16.gmra.mxu0 %v224
    %v530 = vpop.f32.mrf.mxu0
    %v531 = vadd.f32 %v396, %v530
    %v532 = vpop.f32.mrf.mxu0
    %v533 = vadd.f32 %v396, %v532
    %534 = vdwg.mxu0
    %v535 = vld [vmem:[#allocation8] sm:$0xf]
    %v536 = vld [vmem:[#allocation8 + $0x4] sm:$0xf]
    %v537 = vld [vmem:[#allocation8 + $0x8] sm:$0xf]
    %v538 = vld [vmem:[#allocation8 + $0xc] sm:$0xf]
    %v539 = vld [vmem:[#allocation8 + $0x10] sm:$0xf]
    %v540 = vld [vmem:[#allocation8 + $0x14] sm:$0xf]
    %v541 = vld [vmem:[#allocation8 + $0x18] sm:$0xf]
    %v542 = vld [vmem:[#allocation8 + $0x1c] sm:$0xf]
    %v543 = vld [vmem:[#allocation8 + $0x20] sm:$0xf]
    %v544 = vld [vmem:[#allocation8 + $0x24] sm:$0xf]
    %v545 = vld [vmem:[#allocation8 + $0x28] sm:$0xf]
    %v546 = vld [vmem:[#allocation8 + $0x2c] sm:$0xf]
    %v547 = vld [vmem:[#allocation8 + $0x30] sm:$0xf]
    %v548 = vld [vmem:[#allocation8 + $0x34] sm:$0xf]
    %v549 = vld [vmem:[#allocation8 + $0x38] sm:$0xf]
    %v550 = vld [vmem:[#allocation8 + $0x3c] sm:$0xf]
    %v551 = vld [vmem:[%s6] sm:$0x1]
    %v553 = vperm.slane %v551, 0
    %v571 = vunpack.c.l.b16 %v535
    %v572 = vunpack.c.l.b16 %v536
    %v573 = vunpack.c.l.b16 %v537
    %v574 = vunpack.c.l.b16 %v538
    %v575 = vunpack.c.l.b16 %v539
    %v576 = vunpack.c.l.b16 %v540
    %v577 = vunpack.c.l.b16 %v541
    %v578 = vunpack.c.l.b16 %v542
    %v579 = vunpack.c.l.b16 %v543
    %v580 = vunpack.c.l.b16 %v544
    %v581 = vunpack.c.l.b16 %v545
    %v582 = vunpack.c.l.b16 %v546
    %v583 = vunpack.c.l.b16 %v547
    %v584 = vunpack.c.l.b16 %v548
    %v585 = vunpack.c.l.b16 %v549
    %v586 = vunpack.c.l.b16 %v550
    %v587 = vpack.c.b16 %v572, %v571
    %v588 = vpack.c.b16 %v574, %v573
    %v589 = vpack.c.b16 %v576, %v575
    %v590 = vpack.c.b16 %v578, %v577
    %v591 = vpack.c.b16 %v580, %v579
    %v592 = vpack.c.b16 %v582, %v581
    %v593 = vpack.c.b16 %v584, %v583
    %v594 = vpack.c.b16 %v586, %v585
    %603 = vmatpush.bf16.msra.mxu0 %v594
    %604 = vmatpush.bf16.msra.mxu0 %v593
    %605 = vmatpush.bf16.msra.mxu0 %v592
    %606 = vmatpush.bf16.msra.mxu0 %v591
    %607 = vmatpush.bf16.msra.mxu0 %v590
    %608 = vmatpush.bf16.msra.mxu0 %v589
    %609 = vmatpush.bf16.msra.mxu0 %v588
    %610 = vmatpush.bf16.msra.mxu0 %v587
    %611 = vmatmul.bf16.gmra.mxu0 %v209
    %v612 = vpop.f32.mrf.mxu0
    %v613 = vadd.f32 %v553, %v612
    %v614 = vpop.f32.mrf.mxu0
    %v615 = vadd.f32 %v553, %v614
    %616 = vmatmul.bf16.gmra.mxu0 %v210
    %v617 = vpop.f32.mrf.mxu0
    %v618 = vadd.f32 %v553, %v617
    %v619 = vpop.f32.mrf.mxu0
    %v620 = vadd.f32 %v553, %v619
    %621 = vmatmul.bf16.gmra.mxu0 %v211
    %v622 = vpop.f32.mrf.mxu0
    %v623 = vadd.f32 %v553, %v622
    %v624 = vpop.f32.mrf.mxu0
    %v625 = vadd.f32 %v553, %v624
    %626 = vmatmul.bf16.gmra.mxu0 %v212
    %v627 = vpop.f32.mrf.mxu0
    %v628 = vadd.f32 %v553, %v627
    %v629 = vpop.f32.mrf.mxu0
    %v630 = vadd.f32 %v553, %v629
    %631 = vmatmul.bf16.gmra.mxu0 %v213
    %v632 = vpop.f32.mrf.mxu0
    %v633 = vadd.f32 %v553, %v632
    %v634 = vpop.f32.mrf.mxu0
    %v635 = vadd.f32 %v553, %v634
    %636 = vmatmul.bf16.gmra.mxu0 %v214
    %v637 = vpop.f32.mrf.mxu0
    %v638 = vadd.f32 %v553, %v637
    %v639 = vpop.f32.mrf.mxu0
    %v640 = vadd.f32 %v553, %v639
    %641 = vmatmul.bf16.gmra.mxu0 %v215
    %v642 = vpop.f32.mrf.mxu0
    %v643 = vadd.f32 %v553, %v642
    %v644 = vpop.f32.mrf.mxu0
    %v645 = vadd.f32 %v553, %v644
    %646 = vmatmul.bf16.gmra.mxu0 %v216
    %v647 = vpop.f32.mrf.mxu0
    %v648 = vadd.f32 %v553, %v647
    %v649 = vpop.f32.mrf.mxu0
    %v650 = vadd.f32 %v553, %v649
    %651 = vmatmul.bf16.gmra.mxu0 %v217
    %v652 = vpop.f32.mrf.mxu0
    %v653 = vadd.f32 %v553, %v652
    %v654 = vpop.f32.mrf.mxu0
    %v655 = vadd.f32 %v553, %v654
    %656 = vmatmul.bf16.gmra.mxu0 %v218
    %v657 = vpop.f32.mrf.mxu0
    %v658 = vadd.f32 %v553, %v657
    %v659 = vpop.f32.mrf.mxu0
    %v660 = vadd.f32 %v553, %v659
    %661 = vmatmul.bf16.gmra.mxu0 %v219
    %v662 = vpop.f32.mrf.mxu0
    %v663 = vadd.f32 %v553, %v662
    %v664 = vpop.f32.mrf.mxu0
    %v665 = vadd.f32 %v553, %v664
    %666 = vmatmul.bf16.gmra.mxu0 %v220
    %v667 = vpop.f32.mrf.mxu0
    %v668 = vadd.f32 %v553, %v667
    %v669 = vpop.f32.mrf.mxu0
    %v670 = vadd.f32 %v553, %v669
    %671 = vmatmul.bf16.gmra.mxu0 %v221
    %v672 = vpop.f32.mrf.mxu0
    %v673 = vadd.f32 %v553, %v672
    %v674 = vpop.f32.mrf.mxu0
    %v675 = vadd.f32 %v553, %v674
    %676 = vmatmul.bf16.gmra.mxu0 %v222
    %v677 = vpop.f32.mrf.mxu0
    %v678 = vadd.f32 %v553, %v677
    %v679 = vpop.f32.mrf.mxu0
    %v680 = vadd.f32 %v553, %v679
    %681 = vmatmul.bf16.gmra.mxu0 %v223
    %v682 = vpop.f32.mrf.mxu0
    %v683 = vadd.f32 %v553, %v682
    %v684 = vpop.f32.mrf.mxu0
    %v685 = vadd.f32 %v553, %v684
    %686 = vmatmul.bf16.gmra.mxu0 %v224
    %v687 = vpop.f32.mrf.mxu0
    %v688 = vadd.f32 %v553, %v687
    %v689 = vpop.f32.mrf.mxu0
    %v690 = vadd.f32 %v553, %v689
    %691 = vdwg.mxu0
    %v692 = vpack.c.bf16 %v299, %v299
    %v693 = vpack.c.bf16 %v301, %v301
    %v694 = vpack.c.bf16 %v304, %v304
    %v695 = vpack.c.bf16 %v306, %v306
    %v696 = vpack.c.bf16 %v309, %v309
    %v697 = vpack.c.bf16 %v311, %v311
    %v698 = vpack.c.bf16 %v314, %v314
    %v699 = vpack.c.bf16 %v316, %v316
    %v700 = vpack.c.bf16 %v319, %v319
    %v701 = vpack.c.bf16 %v321, %v321
    %v702 = vpack.c.bf16 %v324, %v324
    %v703 = vpack.c.bf16 %v326, %v326
    %v704 = vpack.c.bf16 %v329, %v329
    %v705 = vpack.c.bf16 %v331, %v331
    %v706 = vpack.c.bf16 %v334, %v334
    %v707 = vpack.c.bf16 %v336, %v336
    %v708 = vpack.c.bf16 %v339, %v339
    %v709 = vpack.c.bf16 %v341, %v341
    %v710 = vpack.c.bf16 %v344, %v344
    %v711 = vpack.c.bf16 %v346, %v346
    %v712 = vpack.c.bf16 %v349, %v349
    %v713 = vpack.c.bf16 %v351, %v351
    %v714 = vpack.c.bf16 %v354, %v354
    %v715 = vpack.c.bf16 %v356, %v356
    %v716 = vpack.c.bf16 %v359, %v359
    %v717 = vpack.c.bf16 %v361, %v361
    %v718 = vpack.c.bf16 %v364, %v364
    %v719 = vpack.c.bf16 %v366, %v366
    %v720 = vpack.c.bf16 %v369, %v369
    %v721 = vpack.c.bf16 %v371, %v371
    %v722 = vpack.c.bf16 %v374, %v374
    %v723 = vpack.c.bf16 %v376, %v376
    %v724 = vpack.c.bf16 %v456, %v456
    %v725 = vpack.c.bf16 %v458, %v458
    %v726 = vpack.c.bf16 %v461, %v461
    %v727 = vpack.c.bf16 %v463, %v463
    %v728 = vpack.c.bf16 %v466, %v466
    %v729 = vpack.c.bf16 %v468, %v468
    %v730 = vpack.c.bf16 %v471, %v471
    %v731 = vpack.c.bf16 %v473, %v473
    %v732 = vpack.c.bf16 %v476, %v476
    %v733 = vpack.c.bf16 %v478, %v478
    %v734 = vpack.c.bf16 %v481, %v481
    %v735 = vpack.c.bf16 %v483, %v483
    %v736 = vpack.c.bf16 %v486, %v486
    %v737 = vpack.c.bf16 %v488, %v488
    %v738 = vpack.c.bf16 %v491, %v491
    %v739 = vpack.c.bf16 %v493, %v493
    %v740 = vpack.c.bf16 %v496, %v496
    %v741 = vpack.c.bf16 %v498, %v498
    %v742 = vpack.c.bf16 %v501, %v501
    %v743 = vpack.c.bf16 %v503, %v503
    %v744 = vpack.c.bf16 %v506, %v506
    %v745 = vpack.c.bf16 %v508, %v508
    %v746 = vpack.c.bf16 %v511, %v511
    %v747 = vpack.c.bf16 %v513, %v513
    %v748 = vpack.c.bf16 %v516, %v516
    %v749 = vpack.c.bf16 %v518, %v518
    %v750 = vpack.c.bf16 %v521, %v521
    %v751 = vpack.c.bf16 %v523, %v523
    %v752 = vpack.c.bf16 %v526, %v526
    %v753 = vpack.c.bf16 %v528, %v528
    %v754 = vpack.c.bf16 %v531, %v531
    %v755 = vpack.c.bf16 %v533, %v533
    %v772 = vunpack.c.l.b16 %v692
    %v773 = vunpack.c.l.b16 %v693
    %v774 = vunpack.c.l.b16 %v694
    %v775 = vunpack.c.l.b16 %v695
    %v776 = vunpack.c.l.b16 %v696
    %v777 = vunpack.c.l.b16 %v697
    %v778 = vunpack.c.l.b16 %v698
    %v779 = vunpack.c.l.b16 %v699
    %v780 = vunpack.c.l.b16 %v700
    %v781 = vunpack.c.l.b16 %v701
    %v782 = vunpack.c.l.b16 %v702
    %v783 = vunpack.c.l.b16 %v703
    %v784 = vunpack.c.l.b16 %v704
    %v785 = vunpack.c.l.b16 %v705
    %v786 = vunpack.c.l.b16 %v706
    %v787 = vunpack.c.l.b16 %v707
    %v788 = vpack.c.b16 %v773, %v772
    %v789 = vpack.c.b16 %v775, %v774
    %v790 = vpack.c.b16 %v777, %v776
    %v791 = vpack.c.b16 %v779, %v778
    %v792 = vpack.c.b16 %v781, %v780
    %v793 = vpack.c.b16 %v783, %v782
    %v794 = vpack.c.b16 %v785, %v784
    %v795 = vpack.c.b16 %v787, %v786
    %v820 = vunpack.c.l.b16 %v724
    %v821 = vunpack.c.l.b16 %v725
    %v822 = vunpack.c.l.b16 %v726
    %v823 = vunpack.c.l.b16 %v727
    %v824 = vunpack.c.l.b16 %v728
    %v825 = vunpack.c.l.b16 %v729
    %v826 = vunpack.c.l.b16 %v730
    %v827 = vunpack.c.l.b16 %v731
    %v828 = vunpack.c.l.b16 %v732
    %v829 = vunpack.c.l.b16 %v733
    %v830 = vunpack.c.l.b16 %v734
    %v831 = vunpack.c.l.b16 %v735
    %v832 = vunpack.c.l.b16 %v736
    %v833 = vunpack.c.l.b16 %v737
    %v834 = vunpack.c.l.b16 %v738
    %v835 = vunpack.c.l.b16 %v739
    %v836 = vpack.c.b16 %v821, %v820
    %v837 = vpack.c.b16 %v823, %v822
    %v838 = vpack.c.b16 %v825, %v824
    %v839 = vpack.c.b16 %v827, %v826
    %v840 = vpack.c.b16 %v829, %v828
    %v841 = vpack.c.b16 %v831, %v830
    %v842 = vpack.c.b16 %v833, %v832
    %v843 = vpack.c.b16 %v835, %v834
    %852 = vmatpush.bf16.xpose.msra.mxu0 %v843
    %853 = vmatpush.bf16.xpose.msra.mxu0 %v842
    %854 = vmatpush.bf16.xpose.msra.mxu0 %v841
    %855 = vmatpush.bf16.xpose.msra.mxu0 %v840
    %856 = vmatpush.bf16.xpose.msra.mxu0 %v839
    %857 = vmatpush.bf16.xpose.msra.mxu0 %v838
    %858 = vmatpush.bf16.xpose.msra.mxu0 %v837
    %859 = vmatpush.bf16.xpose.msra.mxu0 %v836
    %860 = vmatmul.bf16.gmra.mxu0 %v788
    %v861 = vpop.f32.mrf.mxu0
    %v862 = vadd.f32 0.0, %v861
    %v863 = vpop.f32.mrf.mxu0
    %v864 = vadd.f32 0.0, %v863
    %865 = vmatmul.bf16.gmra.mxu0 %v789
    %v866 = vpop.f32.mrf.mxu0
    %v867 = vadd.f32 0.0, %v866
    %v868 = vpop.f32.mrf.mxu0
    %v869 = vadd.f32 0.0, %v868
    %870 = vmatmul.bf16.gmra.mxu0 %v790
    %v871 = vpop.f32.mrf.mxu0
    %v872 = vadd.f32 0.0, %v871
    %v873 = vpop.f32.mrf.mxu0
    %v874 = vadd.f32 0.0, %v873
    %875 = vmatmul.bf16.gmra.mxu0 %v791
    %v876 = vpop.f32.mrf.mxu0
    %v877 = vadd.f32 0.0, %v876
    %v878 = vpop.f32.mrf.mxu0
    %v879 = vadd.f32 0.0, %v878
    %880 = vmatmul.bf16.gmra.mxu0 %v792
    %v881 = vpop.f32.mrf.mxu0
    %v882 = vadd.f32 0.0, %v881
    %v883 = vpop.f32.mrf.mxu0
    %v884 = vadd.f32 0.0, %v883
    %885 = vmatmul.bf16.gmra.mxu0 %v793
    %v886 = vpop.f32.mrf.mxu0
    %v887 = vadd.f32 0.0, %v886
    %v888 = vpop.f32.mrf.mxu0
    %v889 = vadd.f32 0.0, %v888
    %890 = vmatmul.bf16.gmra.mxu0 %v794
    %v891 = vpop.f32.mrf.mxu0
    %v892 = vadd.f32 0.0, %v891
    %v893 = vpop.f32.mrf.mxu0
    %v894 = vadd.f32 0.0, %v893
    %895 = vmatmul.bf16.gmra.mxu0 %v795
    %v896 = vpop.f32.mrf.mxu0
    %v897 = vadd.f32 0.0, %v896
    %v898 = vpop.f32.mrf.mxu0
    %v899 = vadd.f32 0.0, %v898
    %900 = vdwg.mxu0
    %v917 = vunpack.c.l.b16 %v708
    %v918 = vunpack.c.l.b16 %v709
    %v919 = vunpack.c.l.b16 %v710
    %v920 = vunpack.c.l.b16 %v711
    %v921 = vunpack.c.l.b16 %v712
    %v922 = vunpack.c.l.b16 %v713
    %v923 = vunpack.c.l.b16 %v714
    %v924 = vunpack.c.l.b16 %v715
    %v925 = vunpack.c.l.b16 %v716
    %v926 = vunpack.c.l.b16 %v717
    %v927 = vunpack.c.l.b16 %v718
    %v928 = vunpack.c.l.b16 %v719
    %v929 = vunpack.c.l.b16 %v720
    %v930 = vunpack.c.l.b16 %v721
    %v931 = vunpack.c.l.b16 %v722
    %v932 = vunpack.c.l.b16 %v723
    %v933 = vpack.c.b16 %v918, %v917
    %v934 = vpack.c.b16 %v920, %v919
    %v935 = vpack.c.b16 %v922, %v921
    %v936 = vpack.c.b16 %v924, %v923
    %v937 = vpack.c.b16 %v926, %v925
    %v938 = vpack.c.b16 %v928, %v927
    %v939 = vpack.c.b16 %v930, %v929
    %v940 = vpack.c.b16 %v932, %v931
    %v965 = vunpack.c.l.b16 %v740
    %v966 = vunpack.c.l.b16 %v741
    %v967 = vunpack.c.l.b16 %v742
    %v968 = vunpack.c.l.b16 %v743
    %v969 = vunpack.c.l.b16 %v744
    %v970 = vunpack.c.l.b16 %v745
    %v971 = vunpack.c.l.b16 %v746
    %v972 = vunpack.c.l.b16 %v747
    %v973 = vunpack.c.l.b16 %v748
    %v974 = vunpack.c.l.b16 %v749
    %v975 = vunpack.c.l.b16 %v750
    %v976 = vunpack.c.l.b16 %v751
    %v977 = vunpack.c.l.b16 %v752
    %v978 = vunpack.c.l.b16 %v753
    %v979 = vunpack.c.l.b16 %v754
    %v980 = vunpack.c.l.b16 %v755
    %v981 = vpack.c.b16 %v966, %v965
    %v982 = vpack.c.b16 %v968, %v967
    %v983 = vpack.c.b16 %v970, %v969
    %v984 = vpack.c.b16 %v972, %v971
    %v985 = vpack.c.b16 %v974, %v973
    %v986 = vpack.c.b16 %v976, %v975
    %v987 = vpack.c.b16 %v978, %v977
    %v988 = vpack.c.b16 %v980, %v979
    %997 = vmatpush.bf16.xpose.msra.mxu0 %v988
    %998 = vmatpush.bf16.xpose.msra.mxu0 %v987
    %999 = vmatpush.bf16.xpose.msra.mxu0 %v986
    %1000 = vmatpush.bf16.xpose.msra.mxu0 %v985
    %1001 = vmatpush.bf16.xpose.msra.mxu0 %v984
    %1002 = vmatpush.bf16.xpose.msra.mxu0 %v983
    %1003 = vmatpush.bf16.xpose.msra.mxu0 %v982
    %1004 = vmatpush.bf16.xpose.msra.mxu0 %v981
    %1005 = vmatmul.bf16.gmra.mxu0 %v933
    %v1006 = vpop.f32.mrf.mxu0
    %v1007 = vadd.f32 0.0, %v1006
    %v1008 = vpop.f32.mrf.mxu0
    %v1009 = vadd.f32 0.0, %v1008
    %1010 = vmatmul.bf16.gmra.mxu0 %v934
    %v1011 = vpop.f32.mrf.mxu0
    %v1012 = vadd.f32 0.0, %v1011
    %v1013 = vpop.f32.mrf.mxu0
    %v1014 = vadd.f32 0.0, %v1013
    %1015 = vmatmul.bf16.gmra.mxu0 %v935
    %v1016 = vpop.f32.mrf.mxu0
    %v1017 = vadd.f32 0.0, %v1016
    %v1018 = vpop.f32.mrf.mxu0
    %v1019 = vadd.f32 0.0, %v1018
    %1020 = vmatmul.bf16.gmra.mxu0 %v936
    %v1021 = vpop.f32.mrf.mxu0
    %v1022 = vadd.f32 0.0, %v1021
    %v1023 = vpop.f32.mrf.mxu0
    %v1024 = vadd.f32 0.0, %v1023
    %1025 = vmatmul.bf16.gmra.mxu0 %v937
    %v1026 = vpop.f32.mrf.mxu0
    %v1027 = vadd.f32 0.0, %v1026
    %v1028 = vpop.f32.mrf.mxu0
    %v1029 = vadd.f32 0.0, %v1028
    %1030 = vmatmul.bf16.gmra.mxu0 %v938
    %v1031 = vpop.f32.mrf.mxu0
    %v1032 = vadd.f32 0.0, %v1031
    %v1033 = vpop.f32.mrf.mxu0
    %v1034 = vadd.f32 0.0, %v1033
    %1035 = vmatmul.bf16.gmra.mxu0 %v939
    %v1036 = vpop.f32.mrf.mxu0
    %v1037 = vadd.f32 0.0, %v1036
    %v1038 = vpop.f32.mrf.mxu0
    %v1039 = vadd.f32 0.0, %v1038
    %1040 = vmatmul.bf16.gmra.mxu0 %v940
    %v1041 = vpop.f32.mrf.mxu0
    %v1042 = vadd.f32 0.0, %v1041
    %v1043 = vpop.f32.mrf.mxu0
    %v1044 = vadd.f32 0.0, %v1043
    %1045 = vdwg.mxu0
    %v1046 = vlaneseq
    %v1047 = vand.u32 %v1046, 127
    %vm1048 = vcmp.lt.s32.totalorder %v1047, 8
    %v1049 = vsel %vm1048, 1, 0
    %vm1050 = vcmp.eq.s32.totalorder %v1049, 1
    %v1051 = vsel %vm1050, %v862, -1e+30
    %v1052 = vsel %vm1050, %v864, -1e+30
    %v1053 = vsel %vm1050, %v867, -1e+30
    %v1054 = vsel %vm1050, %v869, -1e+30
    %v1055 = vsel %vm1050, %v872, -1e+30
    %v1056 = vsel %vm1050, %v874, -1e+30
    %v1057 = vsel %vm1050, %v877, -1e+30
    %v1058 = vsel %vm1050, %v879, -1e+30
    %v1059 = vsel %vm1050, %v882, -1e+30
    %v1060 = vsel %vm1050, %v884, -1e+30
    %v1061 = vsel %vm1050, %v887, -1e+30
    %v1062 = vsel %vm1050, %v889, -1e+30
    %v1063 = vsel %vm1050, %v892, -1e+30
    %v1064 = vsel %vm1050, %v894, -1e+30
    %v1065 = vsel %vm1050, %v897, -1e+30
    %v1066 = vsel %vm1050, %v899, -1e+30
    %v1067 = vsel %vm1050, %v1007, -1e+30
    %v1068 = vsel %vm1050, %v1009, -1e+30
    %v1069 = vsel %vm1050, %v1012, -1e+30
    %v1070 = vsel %vm1050, %v1014, -1e+30
    %v1071 = vsel %vm1050, %v1017, -1e+30
    %v1072 = vsel %vm1050, %v1019, -1e+30
    %v1073 = vsel %vm1050, %v1022, -1e+30
    %v1074 = vsel %vm1050, %v1024, -1e+30
    %v1075 = vsel %vm1050, %v1027, -1e+30
    %v1076 = vsel %vm1050, %v1029, -1e+30
    %v1077 = vsel %vm1050, %v1032, -1e+30
    %v1078 = vsel %vm1050, %v1034, -1e+30
    %v1079 = vsel %vm1050, %v1037, -1e+30
    %v1080 = vsel %vm1050, %v1039, -1e+30
    %v1081 = vsel %vm1050, %v1042, -1e+30
    %v1082 = vsel %vm1050, %v1044, -1e+30
    %1083 = vmax.xlane.f32.xlu0 %v1051
    %v1084 = vpop.xlane.xlu0 %1083
    %1085 = vmax.xlane.f32.xlu0 %v1052
    %v1086 = vpop.xlane.xlu0 %1085
    %1087 = vmax.xlane.f32.xlu0 %v1053
    %v1088 = vpop.xlane.xlu0 %1087
    %1089 = vmax.xlane.f32.xlu0 %v1054
    %v1090 = vpop.xlane.xlu0 %1089
    %1091 = vmax.xlane.f32.xlu0 %v1055
    %v1092 = vpop.xlane.xlu0 %1091
    %1093 = vmax.xlane.f32.xlu0 %v1056
    %v1094 = vpop.xlane.xlu0 %1093
    %1095 = vmax.xlane.f32.xlu0 %v1057
    %v1096 = vpop.xlane.xlu0 %1095
    %1097 = vmax.xlane.f32.xlu0 %v1058
    %v1098 = vpop.xlane.xlu0 %1097
    %1099 = vmax.xlane.f32.xlu0 %v1059
    %v1100 = vpop.xlane.xlu0 %1099
    %1101 = vmax.xlane.f32.xlu0 %v1060
    %v1102 = vpop.xlane.xlu0 %1101
    %1103 = vmax.xlane.f32.xlu0 %v1061
    %v1104 = vpop.xlane.xlu0 %1103
    %1105 = vmax.xlane.f32.xlu0 %v1062
    %v1106 = vpop.xlane.xlu0 %1105
    %1107 = vmax.xlane.f32.xlu0 %v1063
    %v1108 = vpop.xlane.xlu0 %1107
    %1109 = vmax.xlane.f32.xlu0 %v1064
    %v1110 = vpop.xlane.xlu0 %1109
    %1111 = vmax.xlane.f32.xlu0 %v1065
    %v1112 = vpop.xlane.xlu0 %1111
    %1113 = vmax.xlane.f32.xlu0 %v1066
    %v1114 = vpop.xlane.xlu0 %1113
    %1115 = vmax.xlane.f32.xlu0 %v1067
    %v1116 = vpop.xlane.xlu0 %1115
    %1117 = vmax.xlane.f32.xlu0 %v1068
    %v1118 = vpop.xlane.xlu0 %1117
    %1119 = vmax.xlane.f32.xlu0 %v1069
    %v1120 = vpop.xlane.xlu0 %1119
    %1121 = vmax.xlane.f32.xlu0 %v1070
    %v1122 = vpop.xlane.xlu0 %1121
    %1123 = vmax.xlane.f32.xlu0 %v1071
    %v1124 = vpop.xlane.xlu0 %1123
    %1125 = vmax.xlane.f32.xlu0 %v1072
    %v1126 = vpop.xlane.xlu0 %1125
    %1127 = vmax.xlane.f32.xlu0 %v1073
    %v1128 = vpop.xlane.xlu0 %1127
    %1129 = vmax.xlane.f32.xlu0 %v1074
    %v1130 = vpop.xlane.xlu0 %1129
    %1131 = vmax.xlane.f32.xlu0 %v1075
    %v1132 = vpop.xlane.xlu0 %1131
    %1133 = vmax.xlane.f32.xlu0 %v1076
    %v1134 = vpop.xlane.xlu0 %1133
    %1135 = vmax.xlane.f32.xlu0 %v1077
    %v1136 = vpop.xlane.xlu0 %1135
    %1137 = vmax.xlane.f32.xlu0 %v1078
    %v1138 = vpop.xlane.xlu0 %1137
    %1139 = vmax.xlane.f32.xlu0 %v1079
    %v1140 = vpop.xlane.xlu0 %1139
    %1141 = vmax.xlane.f32.xlu0 %v1080
    %v1142 = vpop.xlane.xlu0 %1141
    %1143 = vmax.xlane.f32.xlu0 %v1081
    %v1144 = vpop.xlane.xlu0 %1143
    %1145 = vmax.xlane.f32.xlu0 %v1082
    %v1146 = vpop.xlane.xlu0 %1145
    %v1147 = vsub.f32 %v1051, %v1084
    %v1148 = vsub.f32 %v1052, %v1086
    %v1149 = vsub.f32 %v1053, %v1088
    %v1150 = vsub.f32 %v1054, %v1090
    %v1151 = vsub.f32 %v1055, %v1092
    %v1152 = vsub.f32 %v1056, %v1094
    %v1153 = vsub.f32 %v1057, %v1096
    %v1154 = vsub.f32 %v1058, %v1098
    %v1155 = vsub.f32 %v1059, %v1100
    %v1156 = vsub.f32 %v1060, %v1102
    %v1157 = vsub.f32 %v1061, %v1104
    %v1158 = vsub.f32 %v1062, %v1106
    %v1159 = vsub.f32 %v1063, %v1108
    %v1160 = vsub.f32 %v1064, %v1110
    %v1161 = vsub.f32 %v1065, %v1112
    %v1162 = vsub.f32 %v1066, %v1114
    %v1163 = vsub.f32 %v1067, %v1116
    %v1164 = vsub.f32 %v1068, %v1118
    %v1165 = vsub.f32 %v1069, %v1120
    %v1166 = vsub.f32 %v1070, %v1122
    %v1167 = vsub.f32 %v1071, %v1124
    %v1168 = vsub.f32 %v1072, %v1126
    %v1169 = vsub.f32 %v1073, %v1128
    %v1170 = vsub.f32 %v1074, %v1130
    %v1171 = vsub.f32 %v1075, %v1132
    %v1172 = vsub.f32 %v1076, %v1134
    %v1173 = vsub.f32 %v1077, %v1136
    %v1174 = vsub.f32 %v1078, %v1138
    %v1175 = vsub.f32 %v1079, %v1140
    %v1176 = vsub.f32 %v1080, %v1142
    %v1177 = vsub.f32 %v1081, %v1144
    %v1178 = vsub.f32 %v1082, %v1146
    %v1179 = vmul.f32 %v1147, 1.442695
    %v1180 = vpow.pop %v1179
    %v1181 = vmul.f32 %v1148, 1.442695
    %v1182 = vpow.pop %v1181
    %v1183 = vmul.f32 %v1149, 1.442695
    %v1184 = vpow.pop %v1183
    %v1185 = vmul.f32 %v1150, 1.442695
    %v1186 = vpow.pop %v1185
    %v1187 = vmul.f32 %v1151, 1.442695
    %v1188 = vpow.pop %v1187
    %v1189 = vmul.f32 %v1152, 1.442695
    %v1190 = vpow.pop %v1189
    %v1191 = vmul.f32 %v1153, 1.442695
    %v1192 = vpow.pop %v1191
    %v1193 = vmul.f32 %v1154, 1.442695
    %v1194 = vpow.pop %v1193
    %v1195 = vmul.f32 %v1155, 1.442695
    %v1196 = vpow.pop %v1195
    %v1197 = vmul.f32 %v1156, 1.442695
    %v1198 = vpow.pop %v1197
    %v1199 = vmul.f32 %v1157, 1.442695
    %v1200 = vpow.pop %v1199
    %v1201 = vmul.f32 %v1158, 1.442695
    %v1202 = vpow.pop %v1201
    %v1203 = vmul.f32 %v1159, 1.442695
    %v1204 = vpow.pop %v1203
    %v1205 = vmul.f32 %v1160, 1.442695
    %v1206 = vpow.pop %v1205
    %v1207 = vmul.f32 %v1161, 1.442695
    %v1208 = vpow.pop %v1207
    %v1209 = vmul.f32 %v1162, 1.442695
    %v1210 = vpow.pop %v1209
    %v1211 = vmul.f32 %v1163, 1.442695
    %v1212 = vpow.pop %v1211
    %v1213 = vmul.f32 %v1164, 1.442695
    %v1214 = vpow.pop %v1213
    %v1215 = vmul.f32 %v1165, 1.442695
    %v1216 = vpow.pop %v1215
    %v1217 = vmul.f32 %v1166, 1.442695
    %v1218 = vpow.pop %v1217
    %v1219 = vmul.f32 %v1167, 1.442695
    %v1220 = vpow.pop %v1219
    %v1221 = vmul.f32 %v1168, 1.442695
    %v1222 = vpow.pop %v1221
    %v1223 = vmul.f32 %v1169, 1.442695
    %v1224 = vpow.pop %v1223
    %v1225 = vmul.f32 %v1170, 1.442695
    %v1226 = vpow.pop %v1225
    %v1227 = vmul.f32 %v1171, 1.442695
    %v1228 = vpow.pop %v1227
    %v1229 = vmul.f32 %v1172, 1.442695
    %v1230 = vpow.pop %v1229
    %v1231 = vmul.f32 %v1173, 1.442695
    %v1232 = vpow.pop %v1231
    %v1233 = vmul.f32 %v1174, 1.442695
    %v1234 = vpow.pop %v1233
    %v1235 = vmul.f32 %v1175, 1.442695
    %v1236 = vpow.pop %v1235
    %v1237 = vmul.f32 %v1176, 1.442695
    %v1238 = vpow.pop %v1237
    %v1239 = vmul.f32 %v1177, 1.442695
    %v1240 = vpow.pop %v1239
    %v1241 = vmul.f32 %v1178, 1.442695
    %v1242 = vpow.pop %v1241
    %1243 = vadd.xlane.f32.xlu0 %v1180
    %v1244 = vpop.xlane.xlu0 %1243
    %1245 = vadd.xlane.f32.xlu0 %v1182
    %v1246 = vpop.xlane.xlu0 %1245
    %1247 = vadd.xlane.f32.xlu0 %v1184
    %v1248 = vpop.xlane.xlu0 %1247
    %1249 = vadd.xlane.f32.xlu0 %v1186
    %v1250 = vpop.xlane.xlu0 %1249
    %1251 = vadd.xlane.f32.xlu0 %v1188
    %v1252 = vpop.xlane.xlu0 %1251
    %1253 = vadd.xlane.f32.xlu0 %v1190
    %v1254 = vpop.xlane.xlu0 %1253
    %1255 = vadd.xlane.f32.xlu0 %v1192
    %v1256 = vpop.xlane.xlu0 %1255
    %1257 = vadd.xlane.f32.xlu0 %v1194
    %v1258 = vpop.xlane.xlu0 %1257
    %1259 = vadd.xlane.f32.xlu0 %v1196
    %v1260 = vpop.xlane.xlu0 %1259
    %1261 = vadd.xlane.f32.xlu0 %v1198
    %v1262 = vpop.xlane.xlu0 %1261
    %1263 = vadd.xlane.f32.xlu0 %v1200
    %v1264 = vpop.xlane.xlu0 %1263
    %1265 = vadd.xlane.f32.xlu0 %v1202
    %v1266 = vpop.xlane.xlu0 %1265
    %1267 = vadd.xlane.f32.xlu0 %v1204
    %v1268 = vpop.xlane.xlu0 %1267
    %1269 = vadd.xlane.f32.xlu0 %v1206
    %v1270 = vpop.xlane.xlu0 %1269
    %1271 = vadd.xlane.f32.xlu0 %v1208
    %v1272 = vpop.xlane.xlu0 %1271
    %1273 = vadd.xlane.f32.xlu0 %v1210
    %v1274 = vpop.xlane.xlu0 %1273
    %1275 = vadd.xlane.f32.xlu0 %v1212
    %v1276 = vpop.xlane.xlu0 %1275
    %1277 = vadd.xlane.f32.xlu0 %v1214
    %v1278 = vpop.xlane.xlu0 %1277
    %1279 = vadd.xlane.f32.xlu0 %v1216
    %v1280 = vpop.xlane.xlu0 %1279
    %1281 = vadd.xlane.f32.xlu0 %v1218
    %v1282 = vpop.xlane.xlu0 %1281
    %1283 = vadd.xlane.f32.xlu0 %v1220
    %v1284 = vpop.xlane.xlu0 %1283
    %1285 = vadd.xlane.f32.xlu0 %v1222
    %v1286 = vpop.xlane.xlu0 %1285
    %1287 = vadd.xlane.f32.xlu0 %v1224
    %v1288 = vpop.xlane.xlu0 %1287
    %1289 = vadd.xlane.f32.xlu0 %v1226
    %v1290 = vpop.xlane.xlu0 %1289
    %1291 = vadd.xlane.f32.xlu0 %v1228
    %v1292 = vpop.xlane.xlu0 %1291
    %1293 = vadd.xlane.f32.xlu0 %v1230
    %v1294 = vpop.xlane.xlu0 %1293
    %1295 = vadd.xlane.f32.xlu0 %v1232
    %v1296 = vpop.xlane.xlu0 %1295
    %1297 = vadd.xlane.f32.xlu0 %v1234
    %v1298 = vpop.xlane.xlu0 %1297
    %1299 = vadd.xlane.f32.xlu0 %v1236
    %v1300 = vpop.xlane.xlu0 %1299
    %1301 = vadd.xlane.f32.xlu0 %v1238
    %v1302 = vpop.xlane.xlu0 %1301
    %1303 = vadd.xlane.f32.xlu0 %v1240
    %v1304 = vpop.xlane.xlu0 %1303
    %1305 = vadd.xlane.f32.xlu0 %v1242
    %v1306 = vpop.xlane.xlu0 %1305
    %v1307 = vrcp.pop %v1244
    %v1308 = vrcp.pop %v1246
    %v1309 = vrcp.pop %v1248
    %v1310 = vrcp.pop %v1250
    %v1311 = vrcp.pop %v1252
    %v1312 = vrcp.pop %v1254
    %v1313 = vrcp.pop %v1256
    %v1314 = vrcp.pop %v1258
    %v1315 = vrcp.pop %v1260
    %v1316 = vrcp.pop %v1262
    %v1317 = vrcp.pop %v1264
    %v1318 = vrcp.pop %v1266
    %v1319 = vrcp.pop %v1268
    %v1320 = vrcp.pop %v1270
    %v1321 = vrcp.pop %v1272
    %v1322 = vrcp.pop %v1274
    %v1323 = vrcp.pop %v1276
    %v1324 = vrcp.pop %v1278
    %v1325 = vrcp.pop %v1280
    %v1326 = vrcp.pop %v1282
    %v1327 = vrcp.pop %v1284
    %v1328 = vrcp.pop %v1286
    %v1329 = vrcp.pop %v1288
    %v1330 = vrcp.pop %v1290
    %v1331 = vrcp.pop %v1292
    %v1332 = vrcp.pop %v1294
    %v1333 = vrcp.pop %v1296
    %v1334 = vrcp.pop %v1298
    %v1335 = vrcp.pop %v1300
    %v1336 = vrcp.pop %v1302
    %v1337 = vrcp.pop %v1304
    %v1338 = vrcp.pop %v1306
    %v1339 = vmul.f32 %v1180, %v1307
    %v1340 = vmul.f32 %v1182, %v1308
    %v1341 = vmul.f32 %v1184, %v1309
    %v1342 = vmul.f32 %v1186, %v1310
    %v1343 = vmul.f32 %v1188, %v1311
    %v1344 = vmul.f32 %v1190, %v1312
    %v1345 = vmul.f32 %v1192, %v1313
    %v1346 = vmul.f32 %v1194, %v1314
    %v1347 = vmul.f32 %v1196, %v1315
    %v1348 = vmul.f32 %v1198, %v1316
    %v1349 = vmul.f32 %v1200, %v1317
    %v1350 = vmul.f32 %v1202, %v1318
    %v1351 = vmul.f32 %v1204, %v1319
    %v1352 = vmul.f32 %v1206, %v1320
    %v1353 = vmul.f32 %v1208, %v1321
    %v1354 = vmul.f32 %v1210, %v1322
    %v1355 = vmul.f32 %v1212, %v1323
    %v1356 = vmul.f32 %v1214, %v1324
    %v1357 = vmul.f32 %v1216, %v1325
    %v1358 = vmul.f32 %v1218, %v1326
    %v1359 = vmul.f32 %v1220, %v1327
    %v1360 = vmul.f32 %v1222, %v1328
    %v1361 = vmul.f32 %v1224, %v1329
    %v1362 = vmul.f32 %v1226, %v1330
    %v1363 = vmul.f32 %v1228, %v1331
    %v1364 = vmul.f32 %v1230, %v1332
    %v1365 = vmul.f32 %v1232, %v1333
    %v1366 = vmul.f32 %v1234, %v1334
    %v1367 = vmul.f32 %v1236, %v1335
    %v1368 = vmul.f32 %v1238, %v1336
    %v1369 = vmul.f32 %v1240, %v1337
    %v1370 = vmul.f32 %v1242, %v1338
    %v1371 = vpack.c.bf16 %v1339, %v1339
    %v1372 = vpack.c.bf16 %v1340, %v1340
    %v1373 = vpack.c.bf16 %v1341, %v1341
    %v1374 = vpack.c.bf16 %v1342, %v1342
    %v1375 = vpack.c.bf16 %v1343, %v1343
    %v1376 = vpack.c.bf16 %v1344, %v1344
    %v1377 = vpack.c.bf16 %v1345, %v1345
    %v1378 = vpack.c.bf16 %v1346, %v1346
    %v1379 = vpack.c.bf16 %v1347, %v1347
    %v1380 = vpack.c.bf16 %v1348, %v1348
    %v1381 = vpack.c.bf16 %v1349, %v1349
    %v1382 = vpack.c.bf16 %v1350, %v1350
    %v1383 = vpack.c.bf16 %v1351, %v1351
    %v1384 = vpack.c.bf16 %v1352, %v1352
    %v1385 = vpack.c.bf16 %v1353, %v1353
    %v1386 = vpack.c.bf16 %v1354, %v1354
    %v1387 = vpack.c.bf16 %v1355, %v1355
    %v1388 = vpack.c.bf16 %v1356, %v1356
    %v1389 = vpack.c.bf16 %v1357, %v1357
    %v1390 = vpack.c.bf16 %v1358, %v1358
    %v1391 = vpack.c.bf16 %v1359, %v1359
    %v1392 = vpack.c.bf16 %v1360, %v1360
    %v1393 = vpack.c.bf16 %v1361, %v1361
    %v1394 = vpack.c.bf16 %v1362, %v1362
    %v1395 = vpack.c.bf16 %v1363, %v1363
    %v1396 = vpack.c.bf16 %v1364, %v1364
    %v1397 = vpack.c.bf16 %v1365, %v1365
    %v1398 = vpack.c.bf16 %v1366, %v1366
    %v1399 = vpack.c.bf16 %v1367, %v1367
    %v1400 = vpack.c.bf16 %v1368, %v1368
    %v1401 = vpack.c.bf16 %v1369, %v1369
    %v1402 = vpack.c.bf16 %v1370, %v1370
    %v1403 = vpack.c.bf16 %v613, %v613
    %v1404 = vpack.c.bf16 %v615, %v615
    %v1405 = vpack.c.bf16 %v618, %v618
    %v1406 = vpack.c.bf16 %v620, %v620
    %v1407 = vpack.c.bf16 %v623, %v623
    %v1408 = vpack.c.bf16 %v625, %v625
    %v1409 = vpack.c.bf16 %v628, %v628
    %v1410 = vpack.c.bf16 %v630, %v630
    %v1411 = vpack.c.bf16 %v633, %v633
    %v1412 = vpack.c.bf16 %v635, %v635
    %v1413 = vpack.c.bf16 %v638, %v638
    %v1414 = vpack.c.bf16 %v640, %v640
    %v1415 = vpack.c.bf16 %v643, %v643
    %v1416 = vpack.c.bf16 %v645, %v645
    %v1417 = vpack.c.bf16 %v648, %v648
    %v1418 = vpack.c.bf16 %v650, %v650
    %v1419 = vpack.c.bf16 %v653, %v653
    %v1420 = vpack.c.bf16 %v655, %v655
    %v1421 = vpack.c.bf16 %v658, %v658
    %v1422 = vpack.c.bf16 %v660, %v660
    %v1423 = vpack.c.bf16 %v663, %v663
    %v1424 = vpack.c.bf16 %v665, %v665
    %v1425 = vpack.c.bf16 %v668, %v668
    %v1426 = vpack.c.bf16 %v670, %v670
    %v1427 = vpack.c.bf16 %v673, %v673
    %v1428 = vpack.c.bf16 %v675, %v675
    %v1429 = vpack.c.bf16 %v678, %v678
    %v1430 = vpack.c.bf16 %v680, %v680
    %v1431 = vpack.c.bf16 %v683, %v683
    %v1432 = vpack.c.bf16 %v685, %v685
    %v1433 = vpack.c.bf16 %v688, %v688
    %v1434 = vpack.c.bf16 %v690, %v690
    %v1451 = vunpack.c.l.b16 %v1371
    %v1452 = vunpack.c.l.b16 %v1372
    %v1453 = vunpack.c.l.b16 %v1373
    %v1454 = vunpack.c.l.b16 %v1374
    %v1455 = vunpack.c.l.b16 %v1375
    %v1456 = vunpack.c.l.b16 %v1376
    %v1457 = vunpack.c.l.b16 %v1377
    %v1458 = vunpack.c.l.b16 %v1378
    %v1459 = vunpack.c.l.b16 %v1379
    %v1460 = vunpack.c.l.b16 %v1380
    %v1461 = vunpack.c.l.b16 %v1381
    %v1462 = vunpack.c.l.b16 %v1382
    %v1463 = vunpack.c.l.b16 %v1383
    %v1464 = vunpack.c.l.b16 %v1384
    %v1465 = vunpack.c.l.b16 %v1385
    %v1466 = vunpack.c.l.b16 %v1386
    %v1467 = vpack.c.b16 %v1452, %v1451
    %v1468 = vpack.c.b16 %v1454, %v1453
    %v1469 = vpack.c.b16 %v1456, %v1455
    %v1470 = vpack.c.b16 %v1458, %v1457
    %v1471 = vpack.c.b16 %v1460, %v1459
    %v1472 = vpack.c.b16 %v1462, %v1461
    %v1473 = vpack.c.b16 %v1464, %v1463
    %v1474 = vpack.c.b16 %v1466, %v1465
    %v1499 = vunpack.c.l.b16 %v1403
    %v1500 = vunpack.c.l.b16 %v1404
    %v1501 = vunpack.c.l.b16 %v1405
    %v1502 = vunpack.c.l.b16 %v1406
    %v1503 = vunpack.c.l.b16 %v1407
    %v1504 = vunpack.c.l.b16 %v1408
    %v1505 = vunpack.c.l.b16 %v1409
    %v1506 = vunpack.c.l.b16 %v1410
    %v1507 = vunpack.c.l.b16 %v1411
    %v1508 = vunpack.c.l.b16 %v1412
    %v1509 = vunpack.c.l.b16 %v1413
    %v1510 = vunpack.c.l.b16 %v1414
    %v1511 = vunpack.c.l.b16 %v1415
    %v1512 = vunpack.c.l.b16 %v1416
    %v1513 = vunpack.c.l.b16 %v1417
    %v1514 = vunpack.c.l.b16 %v1418
    %v1515 = vpack.c.b16 %v1500, %v1499
    %v1516 = vpack.c.b16 %v1502, %v1501
    %v1517 = vpack.c.b16 %v1504, %v1503
    %v1518 = vpack.c.b16 %v1506, %v1505
    %v1519 = vpack.c.b16 %v1508, %v1507
    %v1520 = vpack.c.b16 %v1510, %v1509
    %v1521 = vpack.c.b16 %v1512, %v1511
    %v1522 = vpack.c.b16 %v1514, %v1513
    %1531 = vmatpush.bf16.msra.mxu0 %v1522
    %1532 = vmatpush.bf16.msra.mxu0 %v1521
    %1533 = vmatpush.bf16.msra.mxu0 %v1520
    %1534 = vmatpush.bf16.msra.mxu0 %v1519
    %1535 = vmatpush.bf16.msra.mxu0 %v1518
    %1536 = vmatpush.bf16.msra.mxu0 %v1517
    %1537 = vmatpush.bf16.msra.mxu0 %v1516
    %1538 = vmatpush.bf16.msra.mxu0 %v1515
    %1539 = vmatmul.bf16.gmra.mxu0 %v1467
    %v1540 = vpop.f32.mrf.mxu0
    %v1541 = vadd.f32 0.0, %v1540
    %v1542 = vpop.f32.mrf.mxu0
    %v1543 = vadd.f32 0.0, %v1542
    %1544 = vmatmul.bf16.gmra.mxu0 %v1468
    %v1545 = vpop.f32.mrf.mxu0
    %v1546 = vadd.f32 0.0, %v1545
    %v1547 = vpop.f32.mrf.mxu0
    %v1548 = vadd.f32 0.0, %v1547
    %1549 = vmatmul.bf16.gmra.mxu0 %v1469
    %v1550 = vpop.f32.mrf.mxu0
    %v1551 = vadd.f32 0.0, %v1550
    %v1552 = vpop.f32.mrf.mxu0
    %v1553 = vadd.f32 0.0, %v1552
    %1554 = vmatmul.bf16.gmra.mxu0 %v1470
    %v1555 = vpop.f32.mrf.mxu0
    %v1556 = vadd.f32 0.0, %v1555
    %v1557 = vpop.f32.mrf.mxu0
    %v1558 = vadd.f32 0.0, %v1557
    %1559 = vmatmul.bf16.gmra.mxu0 %v1471
    %v1560 = vpop.f32.mrf.mxu0
    %v1561 = vadd.f32 0.0, %v1560
    %v1562 = vpop.f32.mrf.mxu0
    %v1563 = vadd.f32 0.0, %v1562
    %1564 = vmatmul.bf16.gmra.mxu0 %v1472
    %v1565 = vpop.f32.mrf.mxu0
    %v1566 = vadd.f32 0.0, %v1565
    %v1567 = vpop.f32.mrf.mxu0
    %v1568 = vadd.f32 0.0, %v1567
    %1569 = vmatmul.bf16.gmra.mxu0 %v1473
    %v1570 = vpop.f32.mrf.mxu0
    %v1571 = vadd.f32 0.0, %v1570
    %v1572 = vpop.f32.mrf.mxu0
    %v1573 = vadd.f32 0.0, %v1572
    %1574 = vmatmul.bf16.gmra.mxu0 %v1474
    %v1575 = vpop.f32.mrf.mxu0
    %v1576 = vadd.f32 0.0, %v1575
    %v1577 = vpop.f32.mrf.mxu0
    %v1578 = vadd.f32 0.0, %v1577
    %1579 = vdwg.mxu0
    %v1596 = vunpack.c.l.b16 %v1387
    %v1597 = vunpack.c.l.b16 %v1388
    %v1598 = vunpack.c.l.b16 %v1389
    %v1599 = vunpack.c.l.b16 %v1390
    %v1600 = vunpack.c.l.b16 %v1391
    %v1601 = vunpack.c.l.b16 %v1392
    %v1602 = vunpack.c.l.b16 %v1393
    %v1603 = vunpack.c.l.b16 %v1394
    %v1604 = vunpack.c.l.b16 %v1395
    %v1605 = vunpack.c.l.b16 %v1396
    %v1606 = vunpack.c.l.b16 %v1397
    %v1607 = vunpack.c.l.b16 %v1398
    %v1608 = vunpack.c.l.b16 %v1399
    %v1609 = vunpack.c.l.b16 %v1400
    %v1610 = vunpack.c.l.b16 %v1401
    %v1611 = vunpack.c.l.b16 %v1402
    %v1612 = vpack.c.b16 %v1597, %v1596
    %v1613 = vpack.c.b16 %v1599, %v1598
    %v1614 = vpack.c.b16 %v1601, %v1600
    %v1615 = vpack.c.b16 %v1603, %v1602
    %v1616 = vpack.c.b16 %v1605, %v1604
    %v1617 = vpack.c.b16 %v1607, %v1606
    %v1618 = vpack.c.b16 %v1609, %v1608
    %v1619 = vpack.c.b16 %v1611, %v1610
    %v1644 = vunpack.c.l.b16 %v1419
    %v1645 = vunpack.c.l.b16 %v1420
    %v1646 = vunpack.c.l.b16 %v1421
    %v1647 = vunpack.c.l.b16 %v1422
    %v1648 = vunpack.c.l.b16 %v1423
    %v1649 = vunpack.c.l.b16 %v1424
    %v1650 = vunpack.c.l.b16 %v1425
    %v1651 = vunpack.c.l.b16 %v1426
    %v1652 = vunpack.c.l.b16 %v1427
    %v1653 = vunpack.c.l.b16 %v1428
    %v1654 = vunpack.c.l.b16 %v1429
    %v1655 = vunpack.c.l.b16 %v1430
    %v1656 = vunpack.c.l.b16 %v1431
    %v1657 = vunpack.c.l.b16 %v1432
    %v1658 = vunpack.c.l.b16 %v1433
    %v1659 = vunpack.c.l.b16 %v1434
    %v1660 = vpack.c.b16 %v1645, %v1644
    %v1661 = vpack.c.b16 %v1647, %v1646
    %v1662 = vpack.c.b16 %v1649, %v1648
    %v1663 = vpack.c.b16 %v1651, %v1650
    %v1664 = vpack.c.b16 %v1653, %v1652
    %v1665 = vpack.c.b16 %v1655, %v1654
    %v1666 = vpack.c.b16 %v1657, %v1656
    %v1667 = vpack.c.b16 %v1659, %v1658
    %1676 = vmatpush.bf16.msra.mxu0 %v1667
    %1677 = vmatpush.bf16.msra.mxu0 %v1666
    %1678 = vmatpush.bf16.msra.mxu0 %v1665
    %1679 = vmatpush.bf16.msra.mxu0 %v1664
    %1680 = vmatpush.bf16.msra.mxu0 %v1663
    %1681 = vmatpush.bf16.msra.mxu0 %v1662
    %1682 = vmatpush.bf16.msra.mxu0 %v1661
    %1683 = vmatpush.bf16.msra.mxu0 %v1660
    %1684 = vmatmul.bf16.gmra.mxu0 %v1612
    %v1685 = vpop.f32.mrf.mxu0
    %v1686 = vadd.f32 0.0, %v1685
    %v1687 = vpop.f32.mrf.mxu0
    %v1688 = vadd.f32 0.0, %v1687
    %1689 = vmatmul.bf16.gmra.mxu0 %v1613
    %v1690 = vpop.f32.mrf.mxu0
    %v1691 = vadd.f32 0.0, %v1690
    %v1692 = vpop.f32.mrf.mxu0
    %v1693 = vadd.f32 0.0, %v1692
    %1694 = vmatmul.bf16.gmra.mxu0 %v1614
    %v1695 = vpop.f32.mrf.mxu0
    %v1696 = vadd.f32 0.0, %v1695
    %v1697 = vpop.f32.mrf.mxu0
    %v1698 = vadd.f32 0.0, %v1697
    %1699 = vmatmul.bf16.gmra.mxu0 %v1615
    %v1700 = vpop.f32.mrf.mxu0
    %v1701 = vadd.f32 0.0, %v1700
    %v1702 = vpop.f32.mrf.mxu0
    %v1703 = vadd.f32 0.0, %v1702
    %1704 = vmatmul.bf16.gmra.mxu0 %v1616
    %v1705 = vpop.f32.mrf.mxu0
    %v1706 = vadd.f32 0.0, %v1705
    %v1707 = vpop.f32.mrf.mxu0
    %v1708 = vadd.f32 0.0, %v1707
    %1709 = vmatmul.bf16.gmra.mxu0 %v1617
    %v1710 = vpop.f32.mrf.mxu0
    %v1711 = vadd.f32 0.0, %v1710
    %v1712 = vpop.f32.mrf.mxu0
    %v1713 = vadd.f32 0.0, %v1712
    %1714 = vmatmul.bf16.gmra.mxu0 %v1618
    %v1715 = vpop.f32.mrf.mxu0
    %v1716 = vadd.f32 0.0, %v1715
    %v1717 = vpop.f32.mrf.mxu0
    %v1718 = vadd.f32 0.0, %v1717
    %1719 = vmatmul.bf16.gmra.mxu0 %v1619
    %v1720 = vpop.f32.mrf.mxu0
    %v1721 = vadd.f32 0.0, %v1720
    %v1722 = vpop.f32.mrf.mxu0
    %v1723 = vadd.f32 0.0, %v1722
    %1724 = vdwg.mxu0
    %1725 = vst [vmem:[#allocation10] sm:$0xff] %v1541
    %1726 = vst [vmem:[#allocation10 + $0x8] sm:$0xff] %v1543
    %1727 = vst [vmem:[#allocation10 + $0x10] sm:$0xff] %v1546
    %1728 = vst [vmem:[#allocation10 + $0x18] sm:$0xff] %v1548
    %1729 = vst [vmem:[#allocation10 + $0x20] sm:$0xff] %v1551
    %1730 = vst [vmem:[#allocation10 + $0x28] sm:$0xff] %v1553
    %1731 = vst [vmem:[#allocation10 + $0x30] sm:$0xff] %v1556
    %1732 = vst [vmem:[#allocation10 + $0x38] sm:$0xff] %v1558
    %1733 = vst [vmem:[#allocation10 + $0x40] sm:$0xff] %v1561
    %1734 = vst [vmem:[#allocation10 + $0x48] sm:$0xff] %v1563
    %1735 = vst [vmem:[#allocation10 + $0x50] sm:$0xff] %v1566
    %1736 = vst [vmem:[#allocation10 + $0x58] sm:$0xff] %v1568
    %1737 = vst [vmem:[#allocation10 + $0x60] sm:$0xff] %v1571
    %1738 = vst [vmem:[#allocation10 + $0x68] sm:$0xff] %v1573
    %1739 = vst [vmem:[#allocation10 + $0x70] sm:$0xff] %v1576
    %1740 = vst [vmem:[#allocation10 + $0x78] sm:$0xff] %v1578
    %1741 = vst [vmem:[#allocation10 + $0x80] sm:$0xff] %v1686
    %1742 = vst [vmem:[#allocation10 + $0x88] sm:$0xff] %v1688
    %1743 = vst [vmem:[#allocation10 + $0x90] sm:$0xff] %v1691
    %1744 = vst [vmem:[#allocation10 + $0x98] sm:$0xff] %v1693
    %1745 = vst [vmem:[#allocation10 + $0xa0] sm:$0xff] %v1696
    %1746 = vst [vmem:[#allocation10 + $0xa8] sm:$0xff] %v1698
    %1747 = vst [vmem:[#allocation10 + $0xb0] sm:$0xff] %v1701
    %1748 = vst [vmem:[#allocation10 + $0xb8] sm:$0xff] %v1703
    %1749 = vst [vmem:[#allocation10 + $0xc0] sm:$0xff] %v1706
    %1750 = vst [vmem:[#allocation10 + $0xc8] sm:$0xff] %v1708
    %1751 = vst [vmem:[#allocation10 + $0xd0] sm:$0xff] %v1711
    %1752 = vst [vmem:[#allocation10 + $0xd8] sm:$0xff] %v1713
    %1753 = vst [vmem:[#allocation10 + $0xe0] sm:$0xff] %v1716
    %1754 = vst [vmem:[#allocation10 + $0xe8] sm:$0xff] %v1718
    %1755 = vst [vmem:[#allocation10 + $0xf0] sm:$0xff] %v1721
    %1756 = vst [vmem:[#allocation10 + $0xf8] sm:$0xff] %v1723
    %1757 = vst [vmem:[#allocation11] sm:$0xff] %v1339
    %1758 = vst [vmem:[#allocation11 + $0x8] sm:$0xff] %v1340
    %1759 = vst [vmem:[#allocation11 + $0x10] sm:$0xff] %v1341
    %1760 = vst [vmem:[#allocation11 + $0x18] sm:$0xff] %v1342
    %1761 = vst [vmem:[#allocation11 + $0x20] sm:$0xff] %v1343
    %1762 = vst [vmem:[#allocation11 + $0x28] sm:$0xff] %v1344
    %1763 = vst [vmem:[#allocation11 + $0x30] sm:$0xff] %v1345
    %1764 = vst [vmem:[#allocation11 + $0x38] sm:$0xff] %v1346
    %1765 = vst [vmem:[#allocation11 + $0x40] sm:$0xff] %v1347
    %1766 = vst [vmem:[#allocation11 + $0x48] sm:$0xff] %v1348
    %1767 = vst [vmem:[#allocation11 + $0x50] sm:$0xff] %v1349
    %1768 = vst [vmem:[#allocation11 + $0x58] sm:$0xff] %v1350
    %1769 = vst [vmem:[#allocation11 + $0x60] sm:$0xff] %v1351
    %1770 = vst [vmem:[#allocation11 + $0x68] sm:$0xff] %v1352
    %1771 = vst [vmem:[#allocation11 + $0x70] sm:$0xff] %v1353
    %1772 = vst [vmem:[#allocation11 + $0x78] sm:$0xff] %v1354
    %1773 = vst [vmem:[#allocation11 + $0x80] sm:$0xff] %v1355
    %1774 = vst [vmem:[#allocation11 + $0x88] sm:$0xff] %v1356
    %1775 = vst [vmem:[#allocation11 + $0x90] sm:$0xff] %v1357
    %1776 = vst [vmem:[#allocation11 + $0x98] sm:$0xff] %v1358
    %1777 = vst [vmem:[#allocation11 + $0xa0] sm:$0xff] %v1359
    %1778 = vst [vmem:[#allocation11 + $0xa8] sm:$0xff] %v1360
    %1779 = vst [vmem:[#allocation11 + $0xb0] sm:$0xff] %v1361
    %1780 = vst [vmem:[#allocation11 + $0xb8] sm:$0xff] %v1362
    %1781 = vst [vmem:[#allocation11 + $0xc0] sm:$0xff] %v1363
    %1782 = vst [vmem:[#allocation11 + $0xc8] sm:$0xff] %v1364
    %1783 = vst [vmem:[#allocation11 + $0xd0] sm:$0xff] %v1365
    %1784 = vst [vmem:[#allocation11 + $0xd8] sm:$0xff] %v1366
    %1785 = vst [vmem:[#allocation11 + $0xe0] sm:$0xff] %v1367
    %1786 = vst [vmem:[#allocation11 + $0xe8] sm:$0xff] %v1368
    %1787 = vst [vmem:[#allocation11 + $0xf0] sm:$0xff] %v1369
    %1788 = vst [vmem:[#allocation11 + $0xf8] sm:$0xff] %v1370
    // Predicated region
    $region46: #{tpu_custom_call.1} parent=1 // pred_check
      _
    $region47: #{tpu_custom_call.1} parent=1 // pred_check_branch
      %1790 = sbr.rel (0) target = $region49
    $region48: #{tpu_custom_call.1} parent=1 // pred_region
      %1792 = vsyncadd [#allocation4], 0
      %s1793 = sshll.u32 [#allocation10], 4
      %s1794 = int_to_ptr.vmem [resolvable:$true] %s1793
      %s1795 = sshll.u32 %s7, 4
      %s1796 = int_to_ptr.hbm [resolvable:$true] %s1795
      %1801 = dma.vmem_to_hbm [thread:$0]  %s1794, 4096, %s1796, [#allocation4], 128, 128, 8
    $region49: #{tpu_custom_call.1} parent=1 // pred_fallthru
      _
    // Predicated region
    $region50: #{tpu_custom_call.1} parent=1 // pred_check
      _
    $region51: #{tpu_custom_call.1} parent=1 // pred_check_branch
      %1803 = sbr.rel (0) target = $region53
    $region52: #{tpu_custom_call.1} parent=1 // pred_region
      %1805 = vsyncadd [#allocation12], 0
      %s1806 = sshll.u32 [#allocation11], 4
      %s1807 = int_to_ptr.vmem [resolvable:$true] %s1806
      %s1808 = sshll.u32 %s8, 4
      %s1809 = int_to_ptr.hbm [resolvable:$true] %s1808
      %1814 = dma.vmem_to_hbm [thread:$0]  %s1807, 4096, %s1809, [#allocation12], 128, 128, 8
    $region53: #{tpu_custom_call.1} parent=1 // pred_fallthru
      _
    // Predicated region
    $region54: #{tpu_custom_call.1} parent=1 // pred_check
      _
    $region55: #{tpu_custom_call.1} parent=1 // pred_check_branch
      %1816 = sbr.rel (0) target = $region57
    $region56: #{tpu_custom_call.1} parent=1 // pred_region
      %1818 = dma.done [#allocation4], 4096
    $region57: #{tpu_custom_call.1} parent=1 // pred_fallthru
      _
    // Predicated region
    $region58: #{tpu_custom_call.1} parent=1 // pred_check
      _
    $region59: #{tpu_custom_call.1} parent=1 // pred_check_branch
      %1820 = sbr.rel (0) target = $region61
    $region60: #{tpu_custom_call.1} parent=1 // pred_region
      %1822 = dma.done [#allocation12], 4096
    $region61: #{tpu_custom_call.1} parent=1 // pred_fallthru
      _
    %1823 = vsyncpa [#allocation3], 1
    %1824 = vsyncpa [#allocation6], 1
    %1825 = vsyncpa [#allocation9], 1
    %1826 = vsyncpa [#allocation4], 1
    %1827 = vsyncpa [#allocation12], 1

</llo_original>
